<compile_context>
chip_gen: v7x
topology: tpu7x:2x2x1
jax: 0.10.0
libtpu: 0.0.40
codegen_flags: <defaults>
</compile_context>

<pallas_src>
import jax
import jax.numpy as jnp
from jax.experimental import pallas as pl
from jax.experimental.pallas import tpu as pltpu


K_IN = 28 * 28          # 784 (multiple of 8; full last dim of x, so legal block dim)
H1 = 512
H2 = 512


def _mlp_kernel(x_ref, w1_ref, b1_ref, w2_ref, b2_ref, o_ref):
    # In-kernel f32 -> bf16 cast of the x tile (VPU work, hidden under MXU).
    x_bf16 = x_ref[...].astype(jnp.bfloat16)

    # Layer 1: (tb, 784)bf16 @ (784, 512)bf16 -> f32 accumulate on the MXU.
    h = jnp.dot(x_bf16, w1_ref[...], preferred_element_type=jnp.float32)
    h = jnp.maximum(h + b1_ref[...], 0.0)          # f32 epilogue (bias broadcast)
    h = h.astype(jnp.bfloat16)                     # bf16 operand for layer 2

    # Layer 2: (tb, 512)bf16 @ (512, 512)bf16 -> f32 accumulate.
    o = jnp.dot(h, w2_ref[...], preferred_element_type=jnp.float32)
    o = jnp.maximum(o + b2_ref[...], 0.0)
    o_ref[...] = o.astype(o_ref.dtype)


def _round_up(x, m):
    return ((x + m - 1) // m) * m


def _choose_tiling(B, tile_b):
    """Pick (tb, b_pad): >= 2 grid steps (v7x megacore) and padding waste
    below one tile, with tb a multiple of 16 (bf16 sublane pack)."""
    n_tiles = max(2, -(-B // tile_b))              # ceil(B / tile_b), at least 2
    tb = _round_up(-(-B // n_tiles), 16)           # ceil(B / n_tiles), 16-aligned
    tb = min(tb, max(16, _round_up(tile_b, 16)))
    b_pad = _round_up(B, tb)
    if b_pad // tb < 2:                            # force >= 2 grid steps
        b_pad = 2 * tb
    return tb, b_pad


def model_extractor_forward(x, w1_bf16, b1, w2_bf16, b2, *,
                            tile_b=512, out_dtype=jnp.float32):
    """x: (B, 1, 28, 28) float32 (NCHW).  Returns (B, 512) in out_dtype.

    w1_bf16: (784, 512) bf16  (PyTorch (512, 784) weight, transposed)
    w2_bf16: (512, 512) bf16  (PyTorch (512, 512) weight, transposed)
    b1, b2 : (512,) float32
    """
    B = x.shape[0]
    x_flat = x.reshape(B, K_IN).astype(jnp.float32)          # nn.Flatten()

    tb, b_pad = _choose_tiling(B, tile_b)
    if b_pad != B:
        x_flat = jnp.pad(x_flat, ((0, b_pad - B), (0, 0)))   # inert padded rows

    b1_2d = b1.reshape(1, H1).astype(jnp.float32)
    b2_2d = b2.reshape(1, H2).astype(jnp.float32)

    grid = (b_pad // tb,)

    flops = 2 * b_pad * (K_IN * H1 + H1 * H2)
    bytes_accessed = (
        b_pad * K_IN * 4                                      # x (f32 in)
        + (K_IN * H1 + H1 * H2) * 2                           # bf16 weights
        + (H1 + H2) * 4                                       # biases
        + b_pad * H2 * jnp.dtype(out_dtype).itemsize          # output
    )

    out = pl.pallas_call(
        _mlp_kernel,
        out_shape=jax.ShapeDtypeStruct((b_pad, H2), out_dtype),
        grid_spec=pltpu.PrefetchScalarGridSpec(
            num_scalar_prefetch=0,
            grid=grid,
            in_specs=[
                pl.BlockSpec((tb, K_IN), lambda i: (i, 0)),   # x tile (pipelined)
                pl.BlockSpec((K_IN, H1), lambda i: (0, 0)),   # w1: VMEM-resident
                pl.BlockSpec((1, H1),    lambda i: (0, 0)),   # b1: VMEM-resident
                pl.BlockSpec((H1, H2),   lambda i: (0, 0)),   # w2: VMEM-resident
                pl.BlockSpec((1, H2),    lambda i: (0, 0)),   # b2: VMEM-resident
            ],
            out_specs=pl.BlockSpec((tb, H2), lambda i: (i, 0)),
        ),
        compiler_params=pltpu.CompilerParams(
            dimension_semantics=("parallel",),                # megacore split
        ),
        cost_estimate=pl.CostEstimate(
            flops=flops, transcendentals=0, bytes_accessed=bytes_accessed),
    )(x_flat, w1_bf16, b1_2d, w2_bf16, b2_2d)

    return out[:B] if b_pad != B else out


def init_params(key):
    """Deterministic init, mimicking nn.Linear's U(-1/sqrt(in), 1/sqrt(in)).

    Weights are stored transposed, (in_features, out_features), cast to bf16
    for the kernel's MXU path; biases stay f32."""
    k1, k2, k3, k4 = jax.random.split(key, 4)
    lim1 = 1.0 / jnp.sqrt(float(K_IN))
    lim2 = 1.0 / jnp.sqrt(float(H1))
    w1 = jax.random.uniform(k1, (K_IN, H1), jnp.float32, -lim1, lim1)
    b1 = jax.random.uniform(k2, (H1,), jnp.float32, -lim1, lim1)
    w2 = jax.random.uniform(k3, (H1, H2), jnp.float32, -lim2, lim2)
    b2 = jax.random.uniform(k4, (H2,), jnp.float32, -lim2, lim2)
    return w1.astype(jnp.bfloat16), b1, w2.astype(jnp.bfloat16), b2


if __name__ == "__main__":
    key = jax.random.PRNGKey(0)
    kx, kp = jax.random.split(key)

    # Small MNIST-like batch: (B, C, H, W) = (2, 1, 28, 28)
    x = jax.random.normal(kx, (2, 1, 28, 28), jnp.float32)
    w1_bf16, b1, w2_bf16, b2 = init_params(kp)

    out = model_extractor_forward(x, w1_bf16, b1, w2_bf16, b2)
    out = jax.block_until_ready(out)

    # Reference in plain JAX with the same bf16 operand rounding as the kernel
    # (bf16 operands, f32 accumulate, f32 epilogue, bf16 intermediate).
    x_flat = x.reshape(x.shape[0], -1)
    xb = x_flat.astype(jnp.bfloat16).astype(jnp.float32)
    w1f = w1_bf16.astype(jnp.float32)
    w2f = w2_bf16.astype(jnp.float32)
    ref_h = jnp.maximum(xb @ w1f + b1, 0.0)
    ref_h = ref_h.astype(jnp.bfloat16).astype(jnp.float32)
    ref = jnp.maximum(ref_h @ w2f + b2, 0.0)

    assert out.shape == (2, 512)
    assert jnp.allclose(out, ref, atol=1e-2, rtol=1e-2)

    print("KERNEL_OK")
</pallas_src>

<mosaic_0001>
module attributes {stable_mosaic.version = 11 : i64} {
  func.func @_mlp_kernel(%arg0: i32, %arg1: memref<16x784xf32, #tpu.memory_space<vmem>>, %arg2: memref<784x512xbf16, #tpu.memory_space<vmem>>, %arg3: memref<1x512xf32, #tpu.memory_space<vmem>>, %arg4: memref<512x512xbf16, #tpu.memory_space<vmem>>, %arg5: memref<1x512xf32, #tpu.memory_space<vmem>>, %arg6: memref<16x512xf32, #tpu.memory_space<vmem>>) attributes {dimension_semantics = [#tpu.dimension_semantics<parallel>], iteration_bounds = array<i64: 2>, scalar_prefetch = 0 : i64, scratch_operands = 0 : i64, tpu.core_type = #tpu.core_type<tc>, window_params = [{transform_indices = @transform_0, window_bounds = array<i64: 16, 784>}, {pipeline_mode = #tpu.pipeline_mode<synchronous>, transform_indices = @transform_1, window_bounds = array<i64: 784, 512>}, {pipeline_mode = #tpu.pipeline_mode<synchronous>, transform_indices = @transform_2, window_bounds = array<i64: 1, 512>}, {pipeline_mode = #tpu.pipeline_mode<synchronous>, transform_indices = @transform_3, window_bounds = array<i64: 512, 512>}, {pipeline_mode = #tpu.pipeline_mode<synchronous>, transform_indices = @transform_4, window_bounds = array<i64: 1, 512>}, {transform_indices = @transform_5, window_bounds = array<i64: 16, 512>}]} {
    %c0 = arith.constant 0 : index
    %c0_0 = arith.constant 0 : index
    %0 = vector.load %arg1[%c0, %c0_0] : memref<16x784xf32, #tpu.memory_space<vmem>>, vector<16x784xf32>
    %1 = arith.truncf %0 : vector<16x784xf32> to vector<16x784xbf16>
    %c0_1 = arith.constant 0 : index
    %c0_2 = arith.constant 0 : index
    %2 = vector.load %arg2[%c0_1, %c0_2] : memref<784x512xbf16, #tpu.memory_space<vmem>>, vector<784x512xbf16>
    %cst = arith.constant dense<0.000000e+00> : vector<16x512xf32>
    %3 = tpu.matmul %1, %2, %cst {dimension_numbers = #tpu.dot_dimension_numbers<[1], [0], [0], [1], [0, 0, 1, 1], [], []>} : vector<16x784xbf16>, vector<784x512xbf16>, vector<16x512xf32> -> vector<16x512xf32>
    %c0_3 = arith.constant 0 : index
    %c0_4 = arith.constant 0 : index
    %4 = vector.load %arg3[%c0_3, %c0_4] : memref<1x512xf32, #tpu.memory_space<vmem>>, vector<1x512xf32>
    %5 = vector.broadcast %4 : vector<1x512xf32> to vector<16x512xf32>
    %6 = arith.addf %3, %5 : vector<16x512xf32>
    %cst_5 = arith.constant 0.000000e+00 : f32
    %7 = vector.broadcast %cst_5 : f32 to vector<16x512xf32>
    %8 = arith.maximumf %6, %7 : vector<16x512xf32>
    %9 = arith.truncf %8 : vector<16x512xf32> to vector<16x512xbf16>
    %c0_6 = arith.constant 0 : index
    %c0_7 = arith.constant 0 : index
    %10 = vector.load %arg4[%c0_6, %c0_7] : memref<512x512xbf16, #tpu.memory_space<vmem>>, vector<512x512xbf16>
    %cst_8 = arith.constant dense<0.000000e+00> : vector<16x512xf32>
    %11 = tpu.matmul %9, %10, %cst_8 {dimension_numbers = #tpu.dot_dimension_numbers<[1], [0], [0], [1], [0, 0, 1, 1], [], []>} : vector<16x512xbf16>, vector<512x512xbf16>, vector<16x512xf32> -> vector<16x512xf32>
    %c0_9 = arith.constant 0 : index
    %c0_10 = arith.constant 0 : index
    %12 = vector.load %arg5[%c0_9, %c0_10] : memref<1x512xf32, #tpu.memory_space<vmem>>, vector<1x512xf32>
    %13 = vector.broadcast %12 : vector<1x512xf32> to vector<16x512xf32>
    %14 = arith.addf %11, %13 : vector<16x512xf32>
    %cst_11 = arith.constant 0.000000e+00 : f32
    %15 = vector.broadcast %cst_11 : f32 to vector<16x512xf32>
    %16 = arith.maximumf %14, %15 : vector<16x512xf32>
    %c0_12 = arith.constant 0 : index
    %c0_13 = arith.constant 0 : index
    %17 = vector.load %arg6[%c0_12, %c0_13] : memref<16x512xf32, #tpu.memory_space<vmem>>, vector<16x512xf32>
    tpu.vector_store %arg6[%c0_12, %c0_13], %16 {strides = array<i32>} : memref<16x512xf32, #tpu.memory_space<vmem>>, vector<16x512xf32>,
    return
  }
  func.func @transform_0(%arg0: i32) -> (i32, i32) {
    %c0_i32 = arith.constant 0 : i32
    %c0_i32_0 = arith.constant 0 : i32
    return %arg0, %c0_i32 : i32, i32
  }
  func.func @transform_1(%arg0: i32) -> (i32, i32) {
    %c0_i32 = arith.constant 0 : i32
    %c0_i32_0 = arith.constant 0 : i32
    %c0_i32_1 = arith.constant 0 : i32
    return %c0_i32, %c0_i32_0 : i32, i32
  }
  func.func @transform_2(%arg0: i32) -> (i32, i32) {
    %c0_i32 = arith.constant 0 : i32
    %c0_i32_0 = arith.constant 0 : i32
    %c0_i32_1 = arith.constant 0 : i32
    return %c0_i32, %c0_i32_0 : i32, i32
  }
  func.func @transform_3(%arg0: i32) -> (i32, i32) {
    %c0_i32 = arith.constant 0 : i32
    %c0_i32_0 = arith.constant 0 : i32
    %c0_i32_1 = arith.constant 0 : i32
    return %c0_i32, %c0_i32_0 : i32, i32
  }
  func.func @transform_4(%arg0: i32) -> (i32, i32) {
    %c0_i32 = arith.constant 0 : i32
    %c0_i32_0 = arith.constant 0 : i32
    %c0_i32_1 = arith.constant 0 : i32
    return %c0_i32, %c0_i32_0 : i32, i32
  }
  func.func @transform_5(%arg0: i32) -> (i32, i32) {
    %c0_i32 = arith.constant 0 : i32
    %c0_i32_0 = arith.constant 0 : i32
    return %arg0, %c0_i32 : i32, i32
  }
}

</mosaic_0001>

<llo_original>
// kernel: tpu_custom_call.1
$region0: #{tpu_custom_call.1}
  #allocation0 [shape = 'u32[]', space=smem, size = 0x4, offset = 0x4, fixed_abs, tag = 'smem constant byte address 0x4 - core index']
  #allocation1 [shape = 'u32[144,128]{1,0:T(1,128)}', space=vmem, size = 0x12000, scoped, tag = 'internal scratch']
  %s0 = inlined_call_operand.hbm [shape: f32[32,784], index: 0, kind: input, shape index: {}]
  %s1 = inlined_call_operand.hbm [shape: bf16[784,512], index: 1, kind: input, shape index: {}]
  %s2 = inlined_call_operand.vmem [shape: f32[1,512], index: 2, kind: input, shape index: {}]
  %s3 = inlined_call_operand.hbm [shape: bf16[512,512], index: 3, kind: input, shape index: {}]
  %s4 = inlined_call_operand.vmem [shape: f32[1,512], index: 4, kind: input, shape index: {}]
  %s5 = inlined_call_operand.hbm [shape: f32[32,512], index: 5, kind: output, shape index: {}]
  %s6 = sld [smem:[#allocation0]]
  $region65: #{tpu_custom_call.1} parent=0
    _
  %s8 = ssub.s32 1, %s6
  %s9 = scalar_select 0, %s8, %s6
  $region1: #{tpu_custom_call.1} parent=0
    #allocation2 [shape = 'u8[114688]{0}', space=vmem, size = 0x1c000, scoped, tag = 'input window, operand 0']
    #allocation3 [shape = 's32[2]{0}', space=sflag, size = 0x8, scoped, tag = 'scoped memory for tpu_custom_call.1']
    #allocation4 [shape = 's32[2]{0}', space=sflag, size = 0x8, scoped, tag = 'scoped memory for tpu_custom_call.1']
    #allocation5 [shape = 'u8[802816]{0}', space=vmem, size = 0xc4000, scoped, tag = 'input window, operand 1, single buffered']
    #allocation6 [shape = 's32[1]{0}', space=sflag, size = 0x4, scoped, tag = 'scoped memory for tpu_custom_call.1']
    #allocation7 [shape = 'u8[524288]{0}', space=vmem, size = 0x80000, scoped, tag = 'input window, operand 3, single buffered']
    #allocation8 [shape = 'u8[65536]{0}', space=vmem, size = 0x10000, scoped, tag = 'output window, operand 0']
    %10 = vsyncpa [#allocation3], 0
    %s11 = scalar_lea.sflag [#allocation3], 1
    %12 = vsyncpa %s11, 0
    %13 = vsyncpa [#allocation6], 0
    %14 = vsyncpa [#allocation4], 0
    %s15 = scalar_lea.sflag [#allocation4], 1
    %16 = vsyncpa %s15, 0
    loop: start=0, step=1, limit=4
    $region2: #{tpu_custom_call.1} parent=1 // loop_pre_header
      _
    $region3: #{tpu_custom_call.1} parent=1 // loop_header
      %s18 = sphi 0, %s22
      %p19 = scmp.ge.s32.totalorder %s18, 4
      %s28 = sphi 0, %s30
      %s31 = sphi 0, %s28
      %s32 = sphi 0, %s31
      %s48 = sphi 0, %s32
      %s52 = sphi 0, %s52
      %s54 = sphi 0, %s52
      %s55 = sphi 0, %s54
      %s69 = sphi 0, %s55
      %s73 = sphi 0, %s73
      %s75 = sphi 0, %s73
      %s76 = sphi 0, %s75
      %s90 = sphi 0, %s76
      %s94 = sphi 0, %s94
      %s96 = sphi 0, %s94
      %s97 = sphi 0, %s96
      %s111 = sphi 0, %s97
      %s115 = sphi 0, %s115
      %s117 = sphi 0, %s115
      %s118 = sphi 0, %s117
      %s132 = sphi 0, %s118
      %s138 = sphi 0, %s140
      %s141 = sphi 0, %s138
      %s142 = sphi 0, %s141
      %s158 = sphi 0, %s142
    $region4: #{tpu_custom_call.1} parent=1 // loop_header_branch
      %21 = sbr.rel (%p19) target = $region8
    $region5: #{tpu_custom_call.1} parent=1 // loop_body
      %s23 = ssub.s32 %s18, 1
      %s24 = ssub.s32 %s18, 2
      %s25 = sadd.s32 %s18, 1
      %s26 = ssub.s32 %s18, %s25
      %p27 = scmp.eq.s32.totalorder %s26, 0
      %s29 = sadd.s32 %s28, 1
      %s30 = scalar_select %p27, %s28, %s29
      %p33 = pneg %p27
      %p34 = scmp.eq.s32.totalorder %s18, 1
      %p35 = por %p33, %p34
      %p36 = scmp.ne.s32.totalorder %s28, %s31
      %p37 = scmp.eq.s32.totalorder %s18, 0
      %p38 = por %p36, %p37
      %p39 = scmp.ne.s32.totalorder %s28, %s31
      %p40 = scmp.eq.s32.totalorder %s23, 1
      %p41 = por %p39, %p40
      %p42 = scmp.ne.s32.totalorder %s31, %s32
      %p43 = scmp.eq.s32.totalorder %s23, 0
      %p44 = por %p42, %p43
      %p45 = scmp.ne.s32.totalorder %s31, %s32
      %p46 = scmp.eq.s32.totalorder %s24, 1
      %p47 = por %p45, %p46
      %p49 = scmp.ne.s32.totalorder %s32, %s48
      %p50 = scmp.eq.s32.totalorder %s24, 0
      %p51 = por %p49, %p50
      %s53 = sadd.s32 %s52, 1
      %p56 = scmp.eq.s32.totalorder %s18, 1
      %p57 = scmp.ne.s32.totalorder %s52, %s54
      %p58 = scmp.eq.s32.totalorder %s18, 0
      %p59 = por %p57, %p58
      %p60 = scmp.ne.s32.totalorder %s52, %s54
      %p61 = scmp.eq.s32.totalorder %s23, 1
      %p62 = por %p60, %p61
      %p63 = scmp.ne.s32.totalorder %s54, %s55
      %p64 = scmp.eq.s32.totalorder %s23, 0
      %p65 = por %p63, %p64
      %p66 = scmp.ne.s32.totalorder %s54, %s55
      %p67 = scmp.eq.s32.totalorder %s24, 1
      %p68 = por %p66, %p67
      %p70 = scmp.ne.s32.totalorder %s55, %s69
      %p71 = scmp.eq.s32.totalorder %s24, 0
      %p72 = por %p70, %p71
      %s74 = sadd.s32 %s73, 1
      %p77 = scmp.eq.s32.totalorder %s18, 1
      %p78 = scmp.ne.s32.totalorder %s73, %s75
      %p79 = scmp.eq.s32.totalorder %s18, 0
      %p80 = por %p78, %p79
      %p81 = scmp.ne.s32.totalorder %s73, %s75
      %p82 = scmp.eq.s32.totalorder %s23, 1
      %p83 = por %p81, %p82
      %p84 = scmp.ne.s32.totalorder %s75, %s76
      %p85 = scmp.eq.s32.totalorder %s23, 0
      %p86 = por %p84, %p85
      %p87 = scmp.ne.s32.totalorder %s75, %s76
      %p88 = scmp.eq.s32.totalorder %s24, 1
      %p89 = por %p87, %p88
      %p91 = scmp.ne.s32.totalorder %s76, %s90
      %p92 = scmp.eq.s32.totalorder %s24, 0
      %p93 = por %p91, %p92
      %s95 = sadd.s32 %s94, 1
      %p98 = scmp.eq.s32.totalorder %s18, 1
      %p99 = scmp.ne.s32.totalorder %s94, %s96
      %p100 = scmp.eq.s32.totalorder %s18, 0
      %p101 = por %p99, %p100
      %p102 = scmp.ne.s32.totalorder %s94, %s96
      %p103 = scmp.eq.s32.totalorder %s23, 1
      %p104 = por %p102, %p103
      %p105 = scmp.ne.s32.totalorder %s96, %s97
      %p106 = scmp.eq.s32.totalorder %s23, 0
      %p107 = por %p105, %p106
      %p108 = scmp.ne.s32.totalorder %s96, %s97
      %p109 = scmp.eq.s32.totalorder %s24, 1
      %p110 = por %p108, %p109
      %p112 = scmp.ne.s32.totalorder %s97, %s111
      %p113 = scmp.eq.s32.totalorder %s24, 0
      %p114 = por %p112, %p113
      %s116 = sadd.s32 %s115, 1
      %p119 = scmp.eq.s32.totalorder %s18, 1
      %p120 = scmp.ne.s32.totalorder %s115, %s117
      %p121 = scmp.eq.s32.totalorder %s18, 0
      %p122 = por %p120, %p121
      %p123 = scmp.ne.s32.totalorder %s115, %s117
      %p124 = scmp.eq.s32.totalorder %s23, 1
      %p125 = por %p123, %p124
      %p126 = scmp.ne.s32.totalorder %s117, %s118
      %p127 = scmp.eq.s32.totalorder %s23, 0
      %p128 = por %p126, %p127
      %p129 = scmp.ne.s32.totalorder %s117, %s118
      %p130 = scmp.eq.s32.totalorder %s24, 1
      %p131 = por %p129, %p130
      %p133 = scmp.ne.s32.totalorder %s118, %s132
      %p134 = scmp.eq.s32.totalorder %s24, 0
      %p135 = por %p133, %p134
      %s136 = ssub.s32 %s18, %s25
      %p137 = scmp.eq.s32.totalorder %s136, 0
      %s139 = sadd.s32 %s138, 1
      %s140 = scalar_select %p137, %s138, %s139
      %p143 = pneg %p137
      %p144 = scmp.eq.s32.totalorder %s18, 1
      %p145 = por %p143, %p144
      %p146 = scmp.ne.s32.totalorder %s138, %s141
      %p147 = scmp.eq.s32.totalorder %s18, 0
      %p148 = por %p146, %p147
      %p149 = scmp.ne.s32.totalorder %s138, %s141
      %p150 = scmp.eq.s32.totalorder %s23, 1
      %p151 = por %p149, %p150
      %p152 = scmp.ne.s32.totalorder %s141, %s142
      %p153 = scmp.eq.s32.totalorder %s23, 0
      %p154 = por %p152, %p153
      %p155 = scmp.ne.s32.totalorder %s141, %s142
      %p156 = scmp.eq.s32.totalorder %s24, 1
      %p157 = por %p155, %p156
      %p159 = scmp.ne.s32.totalorder %s142, %s158
      %p160 = scmp.eq.s32.totalorder %s24, 0
      %p161 = por %p159, %p160
      %p162 = scmp.le.s32.totalorder 1, %s18
      %p163 = scmp.lt.s32.totalorder %s18, 3
      %p164 = pnand %p162, %p163
      %p165 = pneg %p164
      // Predicated region
      $region9: #{tpu_custom_call.1} parent=5 // pred_check
        _
      $region10: #{tpu_custom_call.1} parent=5 // pred_check_branch
        %167 = sbr.rel (%p164) target = $region12
      $region11: #{tpu_custom_call.1} parent=5 // pred_region
        %s168 = ssub.s32 %s18, 1
        // Predicated region
        $region13: #{tpu_custom_call.1} parent=11 // pred_check
          %p169 = pneg %p65
        $region14: #{tpu_custom_call.1} parent=11 // pred_check_branch
          %171 = sbr.rel (%p169) target = $region16
        $region15: #{tpu_custom_call.1} parent=11 // pred_region
          %s173 = ssub.s32 25088, 25088
          %174 = vsyncadd [#allocation6], %s173
          %s175 = sshll.u32 [#allocation5], 4
          %s176 = int_to_ptr.vmem [resolvable:$true] %s175
          %181 = dma.hbm_to_vmem [thread:$0]  %s1, 25088, %s176, [#allocation6], 256, 256, 16
        $region16: #{tpu_custom_call.1} parent=11 // pred_fallthru
          _
        // Predicated region
        $region17: #{tpu_custom_call.1} parent=11 // pred_check
          %p182 = pneg %p86
        $region18: #{tpu_custom_call.1} parent=11 // pred_check_branch
          %184 = sbr.rel (%p182) target = $region20
        $region19: #{tpu_custom_call.1} parent=11 // pred_region
          _
        $region20: #{tpu_custom_call.1} parent=11 // pred_fallthru
          _
        // Predicated region
        $region21: #{tpu_custom_call.1} parent=11 // pred_check
          %p185 = pneg %p107
        $region22: #{tpu_custom_call.1} parent=11 // pred_check_branch
          %187 = sbr.rel (%p185) target = $region24
        $region23: #{tpu_custom_call.1} parent=11 // pred_region
          %s189 = ssub.s32 16384, 16384
          %190 = vsyncadd [#allocation6], %s189
          %s191 = sshll.u32 [#allocation7], 4
          %s192 = int_to_ptr.vmem [resolvable:$true] %s191
          %197 = dma.hbm_to_vmem [thread:$0]  %s3, 16384, %s192, [#allocation6], 256, 256, 16
        $region24: #{tpu_custom_call.1} parent=11 // pred_fallthru
          _
        // Predicated region
        $region25: #{tpu_custom_call.1} parent=11 // pred_check
          %p198 = pneg %p128
        $region26: #{tpu_custom_call.1} parent=11 // pred_check_branch
          %200 = sbr.rel (%p198) target = $region28
        $region27: #{tpu_custom_call.1} parent=11 // pred_region
          _
        $region28: #{tpu_custom_call.1} parent=11 // pred_fallthru
          _
      $region12: #{tpu_custom_call.1} parent=5 // pred_fallthru
        _
      %p201 = scmp.lt.s32.totalorder %s18, 2
      // Predicated region
      $region29: #{tpu_custom_call.1} parent=5 // pred_check
        %p202 = pneg %p201
      $region30: #{tpu_custom_call.1} parent=5 // pred_check_branch
        %204 = sbr.rel (%p202) target = $region32
      $region31: #{tpu_custom_call.1} parent=5 // pred_region
        // Predicated region
        $region33: #{tpu_custom_call.1} parent=31 // pred_check
          %p205 = pneg %p38
        $region34: #{tpu_custom_call.1} parent=31 // pred_check_branch
          %207 = sbr.rel (%p205) target = $region36
        $region35: #{tpu_custom_call.1} parent=31 // pred_region
          %s208 = sand.u32 %s28, 1
          %s209 = scalar_lea.sflag [#allocation3], %s208
          %s210 = sand.u32 %s28, 1
          %s211 = smul.addr %s210, 112
          %s212 = scalar_lea.vmem [#allocation2], %s211
          %s213 = smul.u32 2, %s18
          %s215 = ssub.s32 1792, 1792
          %216 = vsyncadd %s209, %s215
          %s217 = smul.addr %s213, 7
          %s218 = smul.addr %s217, 128
          %s219 = scalar_lea.hbm %s0, %s218
          %s220 = sshll.u32 %s212, 4
          %s221 = int_to_ptr.vmem [resolvable:$true] %s220
          %226 = dma.hbm_to_vmem [thread:$0]  %s219, 1792, %s221, %s209, 896, 896, 56
        $region36: #{tpu_custom_call.1} parent=31 // pred_fallthru
          _
      $region32: #{tpu_custom_call.1} parent=5 // pred_fallthru
        _
      %p227 = scmp.le.s32.totalorder 1, %s18
      %p228 = scmp.lt.s32.totalorder %s18, 3
      %p229 = pnand %p227, %p228
      %p230 = pneg %p229
      // Predicated region
      $region37: #{tpu_custom_call.1} parent=5 // pred_check
        _
      $region38: #{tpu_custom_call.1} parent=5 // pred_check_branch
        %232 = sbr.rel (%p229) target = $region40
      $region39: #{tpu_custom_call.1} parent=5 // pred_region
        %s233 = ssub.s32 %s18, 1
        %s234 = sand.u32 %s31, 1
        %s235 = scalar_lea.sflag [#allocation3], %s234
        %s236 = sand.u32 %s31, 1
        %s237 = smul.addr %s236, 112
        %s238 = scalar_lea.vmem [#allocation2], %s237
        // Predicated region
        $region41: #{tpu_custom_call.1} parent=39 // pred_check
          %p239 = pneg %p44
        $region42: #{tpu_custom_call.1} parent=39 // pred_check_branch
          %241 = sbr.rel (%p239) target = $region44
        $region43: #{tpu_custom_call.1} parent=39 // pred_region
          %242 = dma.done %s235, 1792
        $region44: #{tpu_custom_call.1} parent=39 // pred_fallthru
          _
        // Predicated region
        $region45: #{tpu_custom_call.1} parent=39 // pred_check
          %p243 = pneg %p65
        $region46: #{tpu_custom_call.1} parent=39 // pred_check_branch
          %245 = sbr.rel (%p243) target = $region48
        $region47: #{tpu_custom_call.1} parent=39 // pred_region
          %246 = dma.done [#allocation6], 25088
        $region48: #{tpu_custom_call.1} parent=39 // pred_fallthru
          _
        // Predicated region
        $region49: #{tpu_custom_call.1} parent=39 // pred_check
          %p247 = pneg %p107
        $region50: #{tpu_custom_call.1} parent=39 // pred_check_branch
          %249 = sbr.rel (%p247) target = $region52
        $region51: #{tpu_custom_call.1} parent=39 // pred_region
          %250 = dma.done [#allocation6], 16384
        $region52: #{tpu_custom_call.1} parent=39 // pred_fallthru
          _
        %s251 = sand.u32 %s31, 1
        %s252 = scalar_lea.sflag [#allocation3], %s251
        %s253 = sand.u32 %s31, 1
        %s254 = smul.addr %s253, 112
        %s255 = scalar_lea.vmem [#allocation2], %s254
        %p256 = pneg %p44
        %p257 = pneg %p41
        %p258 = pneg %p65
        %p259 = pneg %p62
        %p260 = pneg %p86
        %p261 = pneg %p83
        %p262 = pneg %p107
        %p263 = pneg %p104
        %p264 = pneg %p128
        %p265 = pneg %p125
        %p266 = pneg %p154
        %p267 = pneg %p151
        %s268 = sand.u32 %s141, 1
        %s269 = scalar_lea.sflag [#allocation4], %s268
        %s270 = sand.u32 %s141, 1
        %s271 = smul.addr %s270, 64
        %s272 = scalar_lea.vmem [#allocation8], %s271
        %s273 = smul.u32 2, %s23
        %s274 = smul.u32 2, %s23
        %v276 = vld [vmem:[%s238] sm:$0xff]
        %v277 = vld [vmem:[%s238 + $0x8] sm:$0xff]
        %v278 = vld [vmem:[%s238 + $0x10] sm:$0xff]
        %v279 = vld [vmem:[%s238 + $0x18] sm:$0xff]
        %v280 = vld [vmem:[%s238 + $0x20] sm:$0xff]
        %v281 = vld [vmem:[%s238 + $0x28] sm:$0xff]
        %v282 = vld [vmem:[%s238 + $0x30] sm:$0xff]
        %v283 = vld [vmem:[%s238 + $0x38] sm:$0xff]
        %v284 = vld [vmem:[%s238 + $0x40] sm:$0xff]
        %v285 = vld [vmem:[%s238 + $0x48] sm:$0xff]
        %v286 = vld [vmem:[%s238 + $0x50] sm:$0xff]
        %v287 = vld [vmem:[%s238 + $0x58] sm:$0xff]
        %v288 = vld [vmem:[%s238 + $0x60] sm:$0xff]
        %v289 = vld [vmem:[%s238 + $0x68] sm:$0xff]
        %v290 = vpack.c.bf16 %v283, %v276
        %v291 = vpack.c.bf16 %v284, %v277
        %v292 = vpack.c.bf16 %v285, %v278
        %v293 = vpack.c.bf16 %v286, %v279
        %v294 = vpack.c.bf16 %v287, %v280
        %v295 = vpack.c.bf16 %v288, %v281
        %v296 = vpack.c.bf16 %v289, %v282
        %v297 = vld [vmem:[#allocation5] sm:$0xff]
        %v298 = vld [vmem:[#allocation5 + $0x8] sm:$0xff]
        %v299 = vld [vmem:[#allocation5 + $0x10] sm:$0xff]
        %v300 = vld [vmem:[#allocation5 + $0x18] sm:$0xff]
        %v301 = vld [vmem:[#allocation5 + $0x20] sm:$0xff]
        %v302 = vld [vmem:[#allocation5 + $0x28] sm:$0xff]
        %v303 = vld [vmem:[#allocation5 + $0x30] sm:$0xff]
        %v304 = vld [vmem:[#allocation5 + $0x38] sm:$0xff]
        %v305 = vld [vmem:[#allocation5 + $0x40] sm:$0xff]
        %v306 = vld [vmem:[#allocation5 + $0x48] sm:$0xff]
        %v307 = vld [vmem:[#allocation5 + $0x50] sm:$0xff]
        %v308 = vld [vmem:[#allocation5 + $0x58] sm:$0xff]
        %v309 = vld [vmem:[#allocation5 + $0x60] sm:$0xff]
        %v310 = vld [vmem:[#allocation5 + $0x68] sm:$0xff]
        %v311 = vld [vmem:[#allocation5 + $0x70] sm:$0xff]
        %v312 = vld [vmem:[#allocation5 + $0x78] sm:$0xff]
        %v313 = vld [vmem:[#allocation5 + $0x80] sm:$0xff]
        %v314 = vld [vmem:[#allocation5 + $0x88] sm:$0xff]
        %v315 = vld [vmem:[#allocation5 + $0x90] sm:$0xff]
        %v316 = vld [vmem:[#allocation5 + $0x98] sm:$0xff]
        %v317 = vld [vmem:[#allocation5 + $0xa0] sm:$0xff]
        %v318 = vld [vmem:[#allocation5 + $0xa8] sm:$0xff]
        %v319 = vld [vmem:[#allocation5 + $0xb0] sm:$0xff]
        %v320 = vld [vmem:[#allocation5 + $0xb8] sm:$0xff]
        %v321 = vld [vmem:[#allocation5 + $0xc0] sm:$0xff]
        %v322 = vld [vmem:[#allocation5 + $0xc8] sm:$0xff]
        %v323 = vld [vmem:[#allocation5 + $0xd0] sm:$0xff]
        %v324 = vld [vmem:[#allocation5 + $0xd8] sm:$0xff]
        %v325 = vld [vmem:[#allocation5 + $0xe0] sm:$0xff]
        %v326 = vld [vmem:[#allocation5 + $0xe8] sm:$0xff]
        %v327 = vld [vmem:[#allocation5 + $0xf0] sm:$0xff]
        %v328 = vld [vmem:[#allocation5 + $0xf8] sm:$0xff]
        %v329 = vld [vmem:[#allocation5 + $0x100] sm:$0xff]
        %v330 = vld [vmem:[#allocation5 + $0x108] sm:$0xff]
        %v331 = vld [vmem:[#allocation5 + $0x110] sm:$0xff]
        %v332 = vld [vmem:[#allocation5 + $0x118] sm:$0xff]
        %v333 = vld [vmem:[#allocation5 + $0x120] sm:$0xff]
        %v334 = vld [vmem:[#allocation5 + $0x128] sm:$0xff]
        %v335 = vld [vmem:[#allocation5 + $0x130] sm:$0xff]
        %v336 = vld [vmem:[#allocation5 + $0x138] sm:$0xff]
        %v337 = vld [vmem:[#allocation5 + $0x140] sm:$0xff]
        %v338 = vld [vmem:[#allocation5 + $0x148] sm:$0xff]
        %v339 = vld [vmem:[#allocation5 + $0x150] sm:$0xff]
        %v340 = vld [vmem:[#allocation5 + $0x158] sm:$0xff]
        %v341 = vld [vmem:[#allocation5 + $0x160] sm:$0xff]
        %v342 = vld [vmem:[#allocation5 + $0x168] sm:$0xff]
        %v343 = vld [vmem:[#allocation5 + $0x170] sm:$0xff]
        %v344 = vld [vmem:[#allocation5 + $0x178] sm:$0xff]
        %v345 = vld [vmem:[#allocation5 + $0x180] sm:$0xff]
        %v346 = vld [vmem:[#allocation5 + $0x188] sm:$0xff]
        %v347 = vld [vmem:[#allocation5 + $0x190] sm:$0xff]
        %v348 = vld [vmem:[#allocation5 + $0x198] sm:$0xff]
        %v349 = vld [vmem:[#allocation5 + $0x1a0] sm:$0xff]
        %v350 = vld [vmem:[#allocation5 + $0x1a8] sm:$0xff]
        %v351 = vld [vmem:[#allocation5 + $0x1b0] sm:$0xff]
        %v352 = vld [vmem:[#allocation5 + $0x1b8] sm:$0xff]
        %v353 = vld [vmem:[#allocation5 + $0x1c0] sm:$0xff]
        %v354 = vld [vmem:[#allocation5 + $0x1c8] sm:$0xff]
        %v355 = vld [vmem:[#allocation5 + $0x1d0] sm:$0xff]
        %v356 = vld [vmem:[#allocation5 + $0x1d8] sm:$0xff]
        %v357 = vld [vmem:[#allocation5 + $0x1e0] sm:$0xff]
        %v358 = vld [vmem:[#allocation5 + $0x1e8] sm:$0xff]
        %v359 = vld [vmem:[#allocation5 + $0x1f0] sm:$0xff]
        %v360 = vld [vmem:[#allocation5 + $0x1f8] sm:$0xff]
        %v361 = vld [vmem:[#allocation5 + $0x200] sm:$0xff]
        %v362 = vld [vmem:[#allocation5 + $0x208] sm:$0xff]
        %v363 = vld [vmem:[#allocation5 + $0x210] sm:$0xff]
        %v364 = vld [vmem:[#allocation5 + $0x218] sm:$0xff]
        %v365 = vld [vmem:[#allocation5 + $0x220] sm:$0xff]
        %v366 = vld [vmem:[#allocation5 + $0x228] sm:$0xff]
        %v367 = vld [vmem:[#allocation5 + $0x230] sm:$0xff]
        %v368 = vld [vmem:[#allocation5 + $0x238] sm:$0xff]
        %v369 = vld [vmem:[#allocation5 + $0x240] sm:$0xff]
        %v370 = vld [vmem:[#allocation5 + $0x248] sm:$0xff]
        %v371 = vld [vmem:[#allocation5 + $0x250] sm:$0xff]
        %v372 = vld [vmem:[#allocation5 + $0x258] sm:$0xff]
        %v373 = vld [vmem:[#allocation5 + $0x260] sm:$0xff]
        %v374 = vld [vmem:[#allocation5 + $0x268] sm:$0xff]
        %v375 = vld [vmem:[#allocation5 + $0x270] sm:$0xff]
        %v376 = vld [vmem:[#allocation5 + $0x278] sm:$0xff]
        %v377 = vld [vmem:[#allocation5 + $0x280] sm:$0xff]
        %v378 = vld [vmem:[#allocation5 + $0x288] sm:$0xff]
        %v379 = vld [vmem:[#allocation5 + $0x290] sm:$0xff]
        %v380 = vld [vmem:[#allocation5 + $0x298] sm:$0xff]
        %v381 = vld [vmem:[#allocation5 + $0x2a0] sm:$0xff]
        %v382 = vld [vmem:[#allocation5 + $0x2a8] sm:$0xff]
        %v383 = vld [vmem:[#allocation5 + $0x2b0] sm:$0xff]
        %v384 = vld [vmem:[#allocation5 + $0x2b8] sm:$0xff]
        %v385 = vld [vmem:[#allocation5 + $0x2c0] sm:$0xff]
        %v386 = vld [vmem:[#allocation5 + $0x2c8] sm:$0xff]
        %v387 = vld [vmem:[#allocation5 + $0x2d0] sm:$0xff]
        %v388 = vld [vmem:[#allocation5 + $0x2d8] sm:$0xff]
        %v389 = vld [vmem:[#allocation5 + $0x2e0] sm:$0xff]
        %v390 = vld [vmem:[#allocation5 + $0x2e8] sm:$0xff]
        %v391 = vld [vmem:[#allocation5 + $0x2f0] sm:$0xff]
        %v392 = vld [vmem:[#allocation5 + $0x2f8] sm:$0xff]
        %v393 = vld [vmem:[#allocation5 + $0x300] sm:$0xff]
        %v394 = vld [vmem:[#allocation5 + $0x308] sm:$0xff]
        %v395 = vld [vmem:[#allocation5 + $0x310] sm:$0xff]
        %v396 = vld [vmem:[#allocation5 + $0x318] sm:$0xff]
        %v397 = vld [vmem:[#allocation5 + $0x320] sm:$0xff]
        %v398 = vld [vmem:[#allocation5 + $0x328] sm:$0xff]
        %v399 = vld [vmem:[#allocation5 + $0x330] sm:$0xff]
        %v400 = vld [vmem:[#allocation5 + $0x338] sm:$0xff]
        %v401 = vld [vmem:[#allocation5 + $0x340] sm:$0xff]
        %v402 = vld [vmem:[#allocation5 + $0x348] sm:$0xff]
        %v403 = vld [vmem:[#allocation5 + $0x350] sm:$0xff]
        %v404 = vld [vmem:[#allocation5 + $0x358] sm:$0xff]
        %v405 = vld [vmem:[#allocation5 + $0x360] sm:$0xff]
        %v406 = vld [vmem:[#allocation5 + $0x368] sm:$0xff]
        %v407 = vld [vmem:[#allocation5 + $0x370] sm:$0xff]
        %v408 = vld [vmem:[#allocation5 + $0x378] sm:$0xff]
        %v409 = vld [vmem:[#allocation5 + $0x380] sm:$0xff]
        %v410 = vld [vmem:[#allocation5 + $0x388] sm:$0xff]
        %v411 = vld [vmem:[#allocation5 + $0x390] sm:$0xff]
        %v412 = vld [vmem:[#allocation5 + $0x398] sm:$0xff]
        %v413 = vld [vmem:[#allocation5 + $0x3a0] sm:$0xff]
        %v414 = vld [vmem:[#allocation5 + $0x3a8] sm:$0xff]
        %v415 = vld [vmem:[#allocation5 + $0x3b0] sm:$0xff]
        %v416 = vld [vmem:[#allocation5 + $0x3b8] sm:$0xff]
        %v417 = vld [vmem:[#allocation5 + $0x3c0] sm:$0xff]
        %v418 = vld [vmem:[#allocation5 + $0x3c8] sm:$0xff]
        %v419 = vld [vmem:[#allocation5 + $0x3d0] sm:$0xff]
        %v420 = vld [vmem:[#allocation5 + $0x3d8] sm:$0xff]
        %v421 = vld [vmem:[#allocation5 + $0x3e0] sm:$0xff]
        %v422 = vld [vmem:[#allocation5 + $0x3e8] sm:$0xff]
        %v423 = vld [vmem:[#allocation5 + $0x3f0] sm:$0xff]
        %v424 = vld [vmem:[#allocation5 + $0x3f8] sm:$0xff]
        %v425 = vld [vmem:[#allocation5 + $0x400] sm:$0xff]
        %v426 = vld [vmem:[#allocation5 + $0x408] sm:$0xff]
        %v427 = vld [vmem:[#allocation5 + $0x410] sm:$0xff]
        %v428 = vld [vmem:[#allocation5 + $0x418] sm:$0xff]
        %v429 = vld [vmem:[#allocation5 + $0x420] sm:$0xff]
        %v430 = vld [vmem:[#allocation5 + $0x428] sm:$0xff]
        %v431 = vld [vmem:[#allocation5 + $0x430] sm:$0xff]
        %v432 = vld [vmem:[#allocation5 + $0x438] sm:$0xff]
        %v433 = vld [vmem:[#allocation5 + $0x440] sm:$0xff]
        %v434 = vld [vmem:[#allocation5 + $0x448] sm:$0xff]
        %v435 = vld [vmem:[#allocation5 + $0x450] sm:$0xff]
        %v436 = vld [vmem:[#allocation5 + $0x458] sm:$0xff]
        %v437 = vld [vmem:[#allocation5 + $0x460] sm:$0xff]
        %v438 = vld [vmem:[#allocation5 + $0x468] sm:$0xff]
        %v439 = vld [vmem:[#allocation5 + $0x470] sm:$0xff]
        %v440 = vld [vmem:[#allocation5 + $0x478] sm:$0xff]
        %v441 = vld [vmem:[#allocation5 + $0x480] sm:$0xff]
        %v442 = vld [vmem:[#allocation5 + $0x488] sm:$0xff]
        %v443 = vld [vmem:[#allocation5 + $0x490] sm:$0xff]
        %v444 = vld [vmem:[#allocation5 + $0x498] sm:$0xff]
        %v445 = vld [vmem:[#allocation5 + $0x4a0] sm:$0xff]
        %v446 = vld [vmem:[#allocation5 + $0x4a8] sm:$0xff]
        %v447 = vld [vmem:[#allocation5 + $0x4b0] sm:$0xff]
        %v448 = vld [vmem:[#allocation5 + $0x4b8] sm:$0xff]
        %v449 = vld [vmem:[#allocation5 + $0x4c0] sm:$0xff]
        %v450 = vld [vmem:[#allocation5 + $0x4c8] sm:$0xff]
        %v451 = vld [vmem:[#allocation5 + $0x4d0] sm:$0xff]
        %v452 = vld [vmem:[#allocation5 + $0x4d8] sm:$0xff]
        %v453 = vld [vmem:[#allocation5 + $0x4e0] sm:$0xff]
        %v454 = vld [vmem:[#allocation5 + $0x4e8] sm:$0xff]
        %v455 = vld [vmem:[#allocation5 + $0x4f0] sm:$0xff]
        %v456 = vld [vmem:[#allocation5 + $0x4f8] sm:$0xff]
        %v457 = vld [vmem:[#allocation5 + $0x500] sm:$0xff]
        %v458 = vld [vmem:[#allocation5 + $0x508] sm:$0xff]
        %v459 = vld [vmem:[#allocation5 + $0x510] sm:$0xff]
        %v460 = vld [vmem:[#allocation5 + $0x518] sm:$0xff]
        %v461 = vld [vmem:[#allocation5 + $0x520] sm:$0xff]
        %v462 = vld [vmem:[#allocation5 + $0x528] sm:$0xff]
        %v463 = vld [vmem:[#allocation5 + $0x530] sm:$0xff]
        %v464 = vld [vmem:[#allocation5 + $0x538] sm:$0xff]
        %v465 = vld [vmem:[#allocation5 + $0x540] sm:$0xff]
        %v466 = vld [vmem:[#allocation5 + $0x548] sm:$0xff]
        %v467 = vld [vmem:[#allocation5 + $0x550] sm:$0xff]
        %v468 = vld [vmem:[#allocation5 + $0x558] sm:$0xff]
        %v469 = vld [vmem:[#allocation5 + $0x560] sm:$0xff]
        %v470 = vld [vmem:[#allocation5 + $0x568] sm:$0xff]
        %v471 = vld [vmem:[#allocation5 + $0x570] sm:$0xff]
        %v472 = vld [vmem:[#allocation5 + $0x578] sm:$0xff]
        %v473 = vld [vmem:[#allocation5 + $0x580] sm:$0xff]
        %v474 = vld [vmem:[#allocation5 + $0x588] sm:$0xff]
        %v475 = vld [vmem:[#allocation5 + $0x590] sm:$0xff]
        %v476 = vld [vmem:[#allocation5 + $0x598] sm:$0xff]
        %v477 = vld [vmem:[#allocation5 + $0x5a0] sm:$0xff]
        %v478 = vld [vmem:[#allocation5 + $0x5a8] sm:$0xff]
        %v479 = vld [vmem:[#allocation5 + $0x5b0] sm:$0xff]
        %v480 = vld [vmem:[#allocation5 + $0x5b8] sm:$0xff]
        %v481 = vld [vmem:[#allocation5 + $0x5c0] sm:$0xff]
        %v482 = vld [vmem:[#allocation5 + $0x5c8] sm:$0xff]
        %v483 = vld [vmem:[#allocation5 + $0x5d0] sm:$0xff]
        %v484 = vld [vmem:[#allocation5 + $0x5d8] sm:$0xff]
        %v485 = vld [vmem:[#allocation5 + $0x5e0] sm:$0xff]
        %v486 = vld [vmem:[#allocation5 + $0x5e8] sm:$0xff]
        %v487 = vld [vmem:[#allocation5 + $0x5f0] sm:$0xff]
        %v488 = vld [vmem:[#allocation5 + $0x5f8] sm:$0xff]
        %v489 = vld [vmem:[#allocation5 + $0x600] sm:$0xff]
        %v490 = vld [vmem:[#allocation5 + $0x608] sm:$0xff]
        %v491 = vld [vmem:[#allocation5 + $0x610] sm:$0xff]
        %v492 = vld [vmem:[#allocation5 + $0x618] sm:$0xff]
        %v493 = vld [vmem:[%s2] sm:$0xf]
        %v495 = vlaneseq
        %v496 = vshrl.u32 %v495, 7
        %v497 = vsub.s32 0, %v496
        %v498 = vrot.slane %v493, %v497
        %v499 = vlaneseq
        %v500 = vshrl.u32 %v499, 7
        %v501 = vsub.s32 1, %v500
        %v502 = vrot.slane %v493, %v501
        %v503 = vlaneseq
        %v504 = vshrl.u32 %v503, 7
        %v505 = vsub.s32 2, %v504
        %v506 = vrot.slane %v493, %v505
        %v507 = vlaneseq
        %v508 = vshrl.u32 %v507, 7
        %v509 = vsub.s32 3, %v508
        %v510 = vrot.slane %v493, %v509
        %v711 = vunpack.c.l.b16 %v297
        %v712 = vunpack.c.h.b16 %v297
        %v713 = vunpack.c.l.b16 %v298
        %v714 = vunpack.c.h.b16 %v298
        %v715 = vunpack.c.l.b16 %v299
        %v716 = vunpack.c.h.b16 %v299
        %v717 = vunpack.c.l.b16 %v300
        %v718 = vunpack.c.h.b16 %v300
        %v719 = vunpack.c.l.b16 %v301
        %v720 = vunpack.c.h.b16 %v301
        %v721 = vunpack.c.l.b16 %v302
        %v722 = vunpack.c.h.b16 %v302
        %v723 = vunpack.c.l.b16 %v303
        %v724 = vunpack.c.h.b16 %v303
        %v725 = vunpack.c.l.b16 %v304
        %v726 = vunpack.c.h.b16 %v304
        %v727 = vunpack.c.l.b16 %v305
        %v728 = vunpack.c.h.b16 %v305
        %v729 = vunpack.c.l.b16 %v306
        %v730 = vunpack.c.h.b16 %v306
        %v731 = vunpack.c.l.b16 %v307
        %v732 = vunpack.c.h.b16 %v307
        %v733 = vunpack.c.l.b16 %v308
        %v734 = vunpack.c.h.b16 %v308
        %v735 = vunpack.c.l.b16 %v309
        %v736 = vunpack.c.h.b16 %v309
        %v737 = vunpack.c.l.b16 %v310
        %v738 = vunpack.c.h.b16 %v310
        %v739 = vunpack.c.l.b16 %v311
        %v740 = vunpack.c.h.b16 %v311
        %v741 = vunpack.c.l.b16 %v312
        %v742 = vunpack.c.h.b16 %v312
        %v743 = vunpack.c.l.b16 %v313
        %v744 = vunpack.c.h.b16 %v313
        %v745 = vunpack.c.l.b16 %v314
        %v746 = vunpack.c.h.b16 %v314
        %v747 = vunpack.c.l.b16 %v315
        %v748 = vunpack.c.h.b16 %v315
        %v749 = vunpack.c.l.b16 %v316
        %v750 = vunpack.c.h.b16 %v316
        %v751 = vunpack.c.l.b16 %v317
        %v752 = vunpack.c.h.b16 %v317
        %v753 = vunpack.c.l.b16 %v318
        %v754 = vunpack.c.h.b16 %v318
        %v755 = vunpack.c.l.b16 %v319
        %v756 = vunpack.c.h.b16 %v319
        %v757 = vunpack.c.l.b16 %v320
        %v758 = vunpack.c.h.b16 %v320
        %v759 = vunpack.c.l.b16 %v321
        %v760 = vunpack.c.h.b16 %v321
        %v761 = vunpack.c.l.b16 %v322
        %v762 = vunpack.c.h.b16 %v322
        %v763 = vunpack.c.l.b16 %v323
        %v764 = vunpack.c.h.b16 %v323
        %v765 = vunpack.c.l.b16 %v324
        %v766 = vunpack.c.h.b16 %v324
        %v767 = vunpack.c.l.b16 %v325
        %v768 = vunpack.c.h.b16 %v325
        %v769 = vunpack.c.l.b16 %v326
        %v770 = vunpack.c.h.b16 %v326
        %v771 = vunpack.c.l.b16 %v327
        %v772 = vunpack.c.h.b16 %v327
        %v773 = vunpack.c.l.b16 %v328
        %v774 = vunpack.c.h.b16 %v328
        %v775 = vunpack.c.l.b16 %v329
        %v776 = vunpack.c.h.b16 %v329
        %v777 = vunpack.c.l.b16 %v330
        %v778 = vunpack.c.h.b16 %v330
        %v779 = vunpack.c.l.b16 %v331
        %v780 = vunpack.c.h.b16 %v331
        %v781 = vunpack.c.l.b16 %v332
        %v782 = vunpack.c.h.b16 %v332
        %v783 = vunpack.c.l.b16 %v333
        %v784 = vunpack.c.h.b16 %v333
        %v785 = vunpack.c.l.b16 %v334
        %v786 = vunpack.c.h.b16 %v334
        %v787 = vunpack.c.l.b16 %v335
        %v788 = vunpack.c.h.b16 %v335
        %v789 = vunpack.c.l.b16 %v336
        %v790 = vunpack.c.h.b16 %v336
        %v791 = vunpack.c.l.b16 %v337
        %v792 = vunpack.c.h.b16 %v337
        %v793 = vunpack.c.l.b16 %v338
        %v794 = vunpack.c.h.b16 %v338
        %v795 = vunpack.c.l.b16 %v339
        %v796 = vunpack.c.h.b16 %v339
        %v797 = vunpack.c.l.b16 %v340
        %v798 = vunpack.c.h.b16 %v340
        %v799 = vunpack.c.l.b16 %v341
        %v800 = vunpack.c.h.b16 %v341
        %v801 = vunpack.c.l.b16 %v342
        %v802 = vunpack.c.h.b16 %v342
        %v803 = vunpack.c.l.b16 %v343
        %v804 = vunpack.c.h.b16 %v343
        %v805 = vunpack.c.l.b16 %v344
        %v806 = vunpack.c.h.b16 %v344
        %v807 = vunpack.c.l.b16 %v345
        %v808 = vunpack.c.h.b16 %v345
        %v809 = vunpack.c.l.b16 %v346
        %v810 = vunpack.c.h.b16 %v346
        %v811 = vunpack.c.l.b16 %v347
        %v812 = vunpack.c.h.b16 %v347
        %v813 = vunpack.c.l.b16 %v348
        %v814 = vunpack.c.h.b16 %v348
        %v815 = vunpack.c.l.b16 %v349
        %v816 = vunpack.c.h.b16 %v349
        %v817 = vunpack.c.l.b16 %v350
        %v818 = vunpack.c.h.b16 %v350
        %v819 = vunpack.c.l.b16 %v351
        %v820 = vunpack.c.h.b16 %v351
        %v821 = vunpack.c.l.b16 %v352
        %v822 = vunpack.c.h.b16 %v352
        %v823 = vunpack.c.l.b16 %v353
        %v824 = vunpack.c.h.b16 %v353
        %v825 = vunpack.c.l.b16 %v354
        %v826 = vunpack.c.h.b16 %v354
        %v827 = vunpack.c.l.b16 %v355
        %v828 = vunpack.c.h.b16 %v355
        %v829 = vunpack.c.l.b16 %v356
        %v830 = vunpack.c.h.b16 %v356
        %v831 = vunpack.c.l.b16 %v357
        %v832 = vunpack.c.h.b16 %v357
        %v833 = vunpack.c.l.b16 %v358
        %v834 = vunpack.c.h.b16 %v358
        %v835 = vunpack.c.l.b16 %v359
        %v836 = vunpack.c.h.b16 %v359
        %v837 = vunpack.c.l.b16 %v360
        %v838 = vunpack.c.h.b16 %v360
        %v839 = vunpack.c.l.b16 %v361
        %v840 = vunpack.c.h.b16 %v361
        %v841 = vunpack.c.l.b16 %v362
        %v842 = vunpack.c.h.b16 %v362
        %v843 = vunpack.c.l.b16 %v363
        %v844 = vunpack.c.h.b16 %v363
        %v845 = vunpack.c.l.b16 %v364
        %v846 = vunpack.c.h.b16 %v364
        %v847 = vunpack.c.l.b16 %v365
        %v848 = vunpack.c.h.b16 %v365
        %v849 = vunpack.c.l.b16 %v366
        %v850 = vunpack.c.h.b16 %v366
        %v851 = vunpack.c.l.b16 %v367
        %v852 = vunpack.c.h.b16 %v367
        %v853 = vunpack.c.l.b16 %v368
        %v854 = vunpack.c.h.b16 %v368
        %v855 = vunpack.c.l.b16 %v369
        %v856 = vunpack.c.h.b16 %v369
        %v857 = vunpack.c.l.b16 %v370
        %v858 = vunpack.c.h.b16 %v370
        %v859 = vunpack.c.l.b16 %v371
        %v860 = vunpack.c.h.b16 %v371
        %v861 = vunpack.c.l.b16 %v372
        %v862 = vunpack.c.h.b16 %v372
        %v863 = vunpack.c.l.b16 %v373
        %v864 = vunpack.c.h.b16 %v373
        %v865 = vunpack.c.l.b16 %v374
        %v866 = vunpack.c.h.b16 %v374
        %v867 = vunpack.c.l.b16 %v375
        %v868 = vunpack.c.h.b16 %v375
        %v869 = vunpack.c.l.b16 %v376
        %v870 = vunpack.c.h.b16 %v376
        %v871 = vunpack.c.l.b16 %v377
        %v872 = vunpack.c.h.b16 %v377
        %v873 = vunpack.c.l.b16 %v378
        %v874 = vunpack.c.h.b16 %v378
        %v875 = vunpack.c.l.b16 %v379
        %v876 = vunpack.c.h.b16 %v379
        %v877 = vunpack.c.l.b16 %v380
        %v878 = vunpack.c.h.b16 %v380
        %v879 = vunpack.c.l.b16 %v381
        %v880 = vunpack.c.h.b16 %v381
        %v881 = vunpack.c.l.b16 %v382
        %v882 = vunpack.c.h.b16 %v382
        %v883 = vunpack.c.l.b16 %v383
        %v884 = vunpack.c.h.b16 %v383
        %v885 = vunpack.c.l.b16 %v384
        %v886 = vunpack.c.h.b16 %v384
        %v887 = vunpack.c.l.b16 %v385
        %v888 = vunpack.c.h.b16 %v385
        %v889 = vunpack.c.l.b16 %v386
        %v890 = vunpack.c.h.b16 %v386
        %v891 = vunpack.c.l.b16 %v387
        %v892 = vunpack.c.h.b16 %v387
        %v893 = vunpack.c.l.b16 %v388
        %v894 = vunpack.c.h.b16 %v388
        %v895 = vunpack.c.l.b16 %v389
        %v896 = vunpack.c.h.b16 %v389
        %v897 = vunpack.c.l.b16 %v390
        %v898 = vunpack.c.h.b16 %v390
        %v899 = vunpack.c.l.b16 %v391
        %v900 = vunpack.c.h.b16 %v391
        %v901 = vunpack.c.l.b16 %v392
        %v902 = vunpack.c.h.b16 %v392
        %v903 = vunpack.c.l.b16 %v393
        %v904 = vunpack.c.h.b16 %v393
        %v905 = vunpack.c.l.b16 %v394
        %v906 = vunpack.c.h.b16 %v394
        %v907 = vunpack.c.l.b16 %v395
        %v908 = vunpack.c.h.b16 %v395
        %v909 = vunpack.c.l.b16 %v396
        %v910 = vunpack.c.h.b16 %v396
        %v911 = vunpack.c.l.b16 %v397
        %v912 = vunpack.c.h.b16 %v397
        %v913 = vunpack.c.l.b16 %v398
        %v914 = vunpack.c.h.b16 %v398
        %v915 = vunpack.c.l.b16 %v399
        %v916 = vunpack.c.h.b16 %v399
        %v917 = vunpack.c.l.b16 %v400
        %v918 = vunpack.c.h.b16 %v400
        %v919 = vunpack.c.l.b16 %v401
        %v920 = vunpack.c.h.b16 %v401
        %v921 = vunpack.c.l.b16 %v402
        %v922 = vunpack.c.h.b16 %v402
        %v923 = vunpack.c.l.b16 %v403
        %v924 = vunpack.c.h.b16 %v403
        %v925 = vunpack.c.l.b16 %v404
        %v926 = vunpack.c.h.b16 %v404
        %v927 = vunpack.c.l.b16 %v405
        %v928 = vunpack.c.h.b16 %v405
        %v929 = vunpack.c.l.b16 %v406
        %v930 = vunpack.c.h.b16 %v406
        %v931 = vunpack.c.l.b16 %v407
        %v932 = vunpack.c.h.b16 %v407
        %v933 = vunpack.c.l.b16 %v408
        %v934 = vunpack.c.h.b16 %v408
        %v935 = vunpack.c.l.b16 %v409
        %v936 = vunpack.c.h.b16 %v409
        %v937 = vunpack.c.l.b16 %v410
        %v938 = vunpack.c.h.b16 %v410
        %v939 = vunpack.c.l.b16 %v411
        %v940 = vunpack.c.h.b16 %v411
        %v941 = vunpack.c.l.b16 %v412
        %v942 = vunpack.c.h.b16 %v412
        %v943 = vunpack.c.l.b16 %v413
        %v944 = vunpack.c.h.b16 %v413
        %v945 = vunpack.c.l.b16 %v414
        %v946 = vunpack.c.h.b16 %v414
        %v947 = vunpack.c.l.b16 %v415
        %v948 = vunpack.c.h.b16 %v415
        %v949 = vunpack.c.l.b16 %v416
        %v950 = vunpack.c.h.b16 %v416
        %v951 = vunpack.c.l.b16 %v417
        %v952 = vunpack.c.h.b16 %v417
        %v953 = vunpack.c.l.b16 %v418
        %v954 = vunpack.c.h.b16 %v418
        %v955 = vunpack.c.l.b16 %v419
        %v956 = vunpack.c.h.b16 %v419
        %v957 = vunpack.c.l.b16 %v420
        %v958 = vunpack.c.h.b16 %v420
        %v959 = vunpack.c.l.b16 %v421
        %v960 = vunpack.c.h.b16 %v421
        %v961 = vunpack.c.l.b16 %v422
        %v962 = vunpack.c.h.b16 %v422
        %v963 = vunpack.c.l.b16 %v423
        %v964 = vunpack.c.h.b16 %v423
        %v965 = vunpack.c.l.b16 %v424
        %v966 = vunpack.c.h.b16 %v424
        %v967 = vunpack.c.l.b16 %v425
        %v968 = vunpack.c.h.b16 %v425
        %v969 = vunpack.c.l.b16 %v426
        %v970 = vunpack.c.h.b16 %v426
        %v971 = vunpack.c.l.b16 %v427
        %v972 = vunpack.c.h.b16 %v427
        %v973 = vunpack.c.l.b16 %v428
        %v974 = vunpack.c.h.b16 %v428
        %v975 = vunpack.c.l.b16 %v429
        %v976 = vunpack.c.h.b16 %v429
        %v977 = vunpack.c.l.b16 %v430
        %v978 = vunpack.c.h.b16 %v430
        %v979 = vunpack.c.l.b16 %v431
        %v980 = vunpack.c.h.b16 %v431
        %v981 = vunpack.c.l.b16 %v432
        %v982 = vunpack.c.h.b16 %v432
        %v983 = vunpack.c.l.b16 %v433
        %v984 = vunpack.c.h.b16 %v433
        %v985 = vunpack.c.l.b16 %v434
        %v986 = vunpack.c.h.b16 %v434
        %v987 = vunpack.c.l.b16 %v435
        %v988 = vunpack.c.h.b16 %v435
        %v989 = vunpack.c.l.b16 %v436
        %v990 = vunpack.c.h.b16 %v436
        %v991 = vunpack.c.l.b16 %v437
        %v992 = vunpack.c.h.b16 %v437
        %v993 = vunpack.c.l.b16 %v438
        %v994 = vunpack.c.h.b16 %v438
        %v995 = vunpack.c.l.b16 %v439
        %v996 = vunpack.c.h.b16 %v439
        %v997 = vunpack.c.l.b16 %v440
        %v998 = vunpack.c.h.b16 %v440
        %v999 = vunpack.c.l.b16 %v441
        %v1000 = vunpack.c.h.b16 %v441
        %v1001 = vunpack.c.l.b16 %v442
        %v1002 = vunpack.c.h.b16 %v442
        %v1003 = vunpack.c.l.b16 %v443
        %v1004 = vunpack.c.h.b16 %v443
        %v1005 = vunpack.c.l.b16 %v444
        %v1006 = vunpack.c.h.b16 %v444
        %v1007 = vunpack.c.l.b16 %v445
        %v1008 = vunpack.c.h.b16 %v445
        %v1009 = vunpack.c.l.b16 %v446
        %v1010 = vunpack.c.h.b16 %v446
        %v1011 = vunpack.c.l.b16 %v447
        %v1012 = vunpack.c.h.b16 %v447
        %v1013 = vunpack.c.l.b16 %v448
        %v1014 = vunpack.c.h.b16 %v448
        %v1015 = vunpack.c.l.b16 %v449
        %v1016 = vunpack.c.h.b16 %v449
        %v1017 = vunpack.c.l.b16 %v450
        %v1018 = vunpack.c.h.b16 %v450
        %v1019 = vunpack.c.l.b16 %v451
        %v1020 = vunpack.c.h.b16 %v451
        %v1021 = vunpack.c.l.b16 %v452
        %v1022 = vunpack.c.h.b16 %v452
        %v1023 = vunpack.c.l.b16 %v453
        %v1024 = vunpack.c.h.b16 %v453
        %v1025 = vunpack.c.l.b16 %v454
        %v1026 = vunpack.c.h.b16 %v454
        %v1027 = vunpack.c.l.b16 %v455
        %v1028 = vunpack.c.h.b16 %v455
        %v1029 = vunpack.c.l.b16 %v456
        %v1030 = vunpack.c.h.b16 %v456
        %v1031 = vunpack.c.l.b16 %v457
        %v1032 = vunpack.c.h.b16 %v457
        %v1033 = vunpack.c.l.b16 %v458
        %v1034 = vunpack.c.h.b16 %v458
        %v1035 = vunpack.c.l.b16 %v459
        %v1036 = vunpack.c.h.b16 %v459
        %v1037 = vunpack.c.l.b16 %v460
        %v1038 = vunpack.c.h.b16 %v460
        %v1039 = vunpack.c.l.b16 %v461
        %v1040 = vunpack.c.h.b16 %v461
        %v1041 = vunpack.c.l.b16 %v462
        %v1042 = vunpack.c.h.b16 %v462
        %v1043 = vunpack.c.l.b16 %v463
        %v1044 = vunpack.c.h.b16 %v463
        %v1045 = vunpack.c.l.b16 %v464
        %v1046 = vunpack.c.h.b16 %v464
        %v1047 = vunpack.c.l.b16 %v465
        %v1048 = vunpack.c.h.b16 %v465
        %v1049 = vunpack.c.l.b16 %v466
        %v1050 = vunpack.c.h.b16 %v466
        %v1051 = vunpack.c.l.b16 %v467
        %v1052 = vunpack.c.h.b16 %v467
        %v1053 = vunpack.c.l.b16 %v468
        %v1054 = vunpack.c.h.b16 %v468
        %v1055 = vunpack.c.l.b16 %v469
        %v1056 = vunpack.c.h.b16 %v469
        %v1057 = vunpack.c.l.b16 %v470
        %v1058 = vunpack.c.h.b16 %v470
        %v1059 = vunpack.c.l.b16 %v471
        %v1060 = vunpack.c.h.b16 %v471
        %v1061 = vunpack.c.l.b16 %v472
        %v1062 = vunpack.c.h.b16 %v472
        %v1063 = vunpack.c.l.b16 %v473
        %v1064 = vunpack.c.h.b16 %v473
        %v1065 = vunpack.c.l.b16 %v474
        %v1066 = vunpack.c.h.b16 %v474
        %v1067 = vunpack.c.l.b16 %v475
        %v1068 = vunpack.c.h.b16 %v475
        %v1069 = vunpack.c.l.b16 %v476
        %v1070 = vunpack.c.h.b16 %v476
        %v1071 = vunpack.c.l.b16 %v477
        %v1072 = vunpack.c.h.b16 %v477
        %v1073 = vunpack.c.l.b16 %v478
        %v1074 = vunpack.c.h.b16 %v478
        %v1075 = vunpack.c.l.b16 %v479
        %v1076 = vunpack.c.h.b16 %v479
        %v1077 = vunpack.c.l.b16 %v480
        %v1078 = vunpack.c.h.b16 %v480
        %v1079 = vunpack.c.l.b16 %v481
        %v1080 = vunpack.c.h.b16 %v481
        %v1081 = vunpack.c.l.b16 %v482
        %v1082 = vunpack.c.h.b16 %v482
        %v1083 = vunpack.c.l.b16 %v483
        %v1084 = vunpack.c.h.b16 %v483
        %v1085 = vunpack.c.l.b16 %v484
        %v1086 = vunpack.c.h.b16 %v484
        %v1087 = vunpack.c.l.b16 %v485
        %v1088 = vunpack.c.h.b16 %v485
        %v1089 = vunpack.c.l.b16 %v486
        %v1090 = vunpack.c.h.b16 %v486
        %v1091 = vunpack.c.l.b16 %v487
        %v1092 = vunpack.c.h.b16 %v487
        %v1093 = vunpack.c.l.b16 %v488
        %v1094 = vunpack.c.h.b16 %v488
        %v1095 = vunpack.c.l.b16 %v489
        %v1096 = vunpack.c.h.b16 %v489
        %v1097 = vunpack.c.l.b16 %v490
        %v1098 = vunpack.c.h.b16 %v490
        %v1099 = vunpack.c.l.b16 %v491
        %v1100 = vunpack.c.h.b16 %v491
        %v1101 = vunpack.c.l.b16 %v492
        %v1102 = vunpack.c.h.b16 %v492
        %v1103 = vpack.c.b16 %v715, %v711
        %v1104 = vpack.c.b16 %v716, %v712
        %v1105 = vpack.c.b16 %v717, %v713
        %v1106 = vpack.c.b16 %v718, %v714
        %v1107 = vpack.c.b16 %v723, %v719
        %v1108 = vpack.c.b16 %v724, %v720
        %v1109 = vpack.c.b16 %v725, %v721
        %v1110 = vpack.c.b16 %v726, %v722
        %v1111 = vpack.c.b16 %v731, %v727
        %v1112 = vpack.c.b16 %v732, %v728
        %v1113 = vpack.c.b16 %v733, %v729
        %v1114 = vpack.c.b16 %v734, %v730
        %v1115 = vpack.c.b16 %v739, %v735
        %v1116 = vpack.c.b16 %v740, %v736
        %v1117 = vpack.c.b16 %v741, %v737
        %v1118 = vpack.c.b16 %v742, %v738
        %v1119 = vpack.c.b16 %v747, %v743
        %v1120 = vpack.c.b16 %v748, %v744
        %v1121 = vpack.c.b16 %v749, %v745
        %v1122 = vpack.c.b16 %v750, %v746
        %v1123 = vpack.c.b16 %v755, %v751
        %v1124 = vpack.c.b16 %v756, %v752
        %v1125 = vpack.c.b16 %v757, %v753
        %v1126 = vpack.c.b16 %v758, %v754
        %v1127 = vpack.c.b16 %v763, %v759
        %v1128 = vpack.c.b16 %v764, %v760
        %v1129 = vpack.c.b16 %v765, %v761
        %v1130 = vpack.c.b16 %v766, %v762
        %v1131 = vpack.c.b16 %v771, %v767
        %v1132 = vpack.c.b16 %v772, %v768
        %v1133 = vpack.c.b16 %v773, %v769
        %v1134 = vpack.c.b16 %v774, %v770
        %v1135 = vpack.c.b16 %v779, %v775
        %v1136 = vpack.c.b16 %v780, %v776
        %v1137 = vpack.c.b16 %v781, %v777
        %v1138 = vpack.c.b16 %v782, %v778
        %v1139 = vpack.c.b16 %v787, %v783
        %v1140 = vpack.c.b16 %v788, %v784
        %v1141 = vpack.c.b16 %v789, %v785
        %v1142 = vpack.c.b16 %v790, %v786
        %v1143 = vpack.c.b16 %v795, %v791
        %v1144 = vpack.c.b16 %v796, %v792
        %v1145 = vpack.c.b16 %v797, %v793
        %v1146 = vpack.c.b16 %v798, %v794
        %v1147 = vpack.c.b16 %v803, %v799
        %v1148 = vpack.c.b16 %v804, %v800
        %v1149 = vpack.c.b16 %v805, %v801
        %v1150 = vpack.c.b16 %v806, %v802
        %v1151 = vpack.c.b16 %v811, %v807
        %v1152 = vpack.c.b16 %v812, %v808
        %v1153 = vpack.c.b16 %v813, %v809
        %v1154 = vpack.c.b16 %v814, %v810
        %v1155 = vpack.c.b16 %v819, %v815
        %v1156 = vpack.c.b16 %v820, %v816
        %v1157 = vpack.c.b16 %v821, %v817
        %v1158 = vpack.c.b16 %v822, %v818
        %v1159 = vpack.c.b16 %v827, %v823
        %v1160 = vpack.c.b16 %v828, %v824
        %v1161 = vpack.c.b16 %v829, %v825
        %v1162 = vpack.c.b16 %v830, %v826
        %v1163 = vpack.c.b16 %v835, %v831
        %v1164 = vpack.c.b16 %v836, %v832
        %v1165 = vpack.c.b16 %v837, %v833
        %v1166 = vpack.c.b16 %v838, %v834
        %v1167 = vpack.c.b16 %v843, %v839
        %v1168 = vpack.c.b16 %v844, %v840
        %v1169 = vpack.c.b16 %v845, %v841
        %v1170 = vpack.c.b16 %v846, %v842
        %v1171 = vpack.c.b16 %v851, %v847
        %v1172 = vpack.c.b16 %v852, %v848
        %v1173 = vpack.c.b16 %v853, %v849
        %v1174 = vpack.c.b16 %v854, %v850
        %v1175 = vpack.c.b16 %v859, %v855
        %v1176 = vpack.c.b16 %v860, %v856
        %v1177 = vpack.c.b16 %v861, %v857
        %v1178 = vpack.c.b16 %v862, %v858
        %v1179 = vpack.c.b16 %v867, %v863
        %v1180 = vpack.c.b16 %v868, %v864
        %v1181 = vpack.c.b16 %v869, %v865
        %v1182 = vpack.c.b16 %v870, %v866
        %v1183 = vpack.c.b16 %v875, %v871
        %v1184 = vpack.c.b16 %v876, %v872
        %v1185 = vpack.c.b16 %v877, %v873
        %v1186 = vpack.c.b16 %v878, %v874
        %v1187 = vpack.c.b16 %v883, %v879
        %v1188 = vpack.c.b16 %v884, %v880
        %v1189 = vpack.c.b16 %v885, %v881
        %v1190 = vpack.c.b16 %v886, %v882
        %v1191 = vpack.c.b16 %v891, %v887
        %v1192 = vpack.c.b16 %v892, %v888
        %v1193 = vpack.c.b16 %v893, %v889
        %v1194 = vpack.c.b16 %v894, %v890
        %v1195 = vpack.c.b16 %v899, %v895
        %v1196 = vpack.c.b16 %v900, %v896
        %v1197 = vpack.c.b16 %v901, %v897
        %v1198 = vpack.c.b16 %v902, %v898
        %v1199 = vpack.c.b16 %v907, %v903
        %v1200 = vpack.c.b16 %v908, %v904
        %v1201 = vpack.c.b16 %v909, %v905
        %v1202 = vpack.c.b16 %v910, %v906
        %v1203 = vpack.c.b16 %v915, %v911
        %v1204 = vpack.c.b16 %v916, %v912
        %v1205 = vpack.c.b16 %v917, %v913
        %v1206 = vpack.c.b16 %v918, %v914
        %v1207 = vpack.c.b16 %v923, %v919
        %v1208 = vpack.c.b16 %v924, %v920
        %v1209 = vpack.c.b16 %v925, %v921
        %v1210 = vpack.c.b16 %v926, %v922
        %v1211 = vpack.c.b16 %v931, %v927
        %v1212 = vpack.c.b16 %v932, %v928
        %v1213 = vpack.c.b16 %v933, %v929
        %v1214 = vpack.c.b16 %v934, %v930
        %v1215 = vpack.c.b16 %v939, %v935
        %v1216 = vpack.c.b16 %v940, %v936
        %v1217 = vpack.c.b16 %v941, %v937
        %v1218 = vpack.c.b16 %v942, %v938
        %v1219 = vpack.c.b16 %v947, %v943
        %v1220 = vpack.c.b16 %v948, %v944
        %v1221 = vpack.c.b16 %v949, %v945
        %v1222 = vpack.c.b16 %v950, %v946
        %v1223 = vpack.c.b16 %v955, %v951
        %v1224 = vpack.c.b16 %v956, %v952
        %v1225 = vpack.c.b16 %v957, %v953
        %v1226 = vpack.c.b16 %v958, %v954
        %v1227 = vpack.c.b16 %v963, %v959
        %v1228 = vpack.c.b16 %v964, %v960
        %v1229 = vpack.c.b16 %v965, %v961
        %v1230 = vpack.c.b16 %v966, %v962
        %v1231 = vpack.c.b16 %v971, %v967
        %v1232 = vpack.c.b16 %v972, %v968
        %v1233 = vpack.c.b16 %v973, %v969
        %v1234 = vpack.c.b16 %v974, %v970
        %v1235 = vpack.c.b16 %v979, %v975
        %v1236 = vpack.c.b16 %v980, %v976
        %v1237 = vpack.c.b16 %v981, %v977
        %v1238 = vpack.c.b16 %v982, %v978
        %v1239 = vpack.c.b16 %v987, %v983
        %v1240 = vpack.c.b16 %v988, %v984
        %v1241 = vpack.c.b16 %v989, %v985
        %v1242 = vpack.c.b16 %v990, %v986
        %v1243 = vpack.c.b16 %v995, %v991
        %v1244 = vpack.c.b16 %v996, %v992
        %v1245 = vpack.c.b16 %v997, %v993
        %v1246 = vpack.c.b16 %v998, %v994
        %v1247 = vpack.c.b16 %v1003, %v999
        %v1248 = vpack.c.b16 %v1004, %v1000
        %v1249 = vpack.c.b16 %v1005, %v1001
        %v1250 = vpack.c.b16 %v1006, %v1002
        %v1251 = vpack.c.b16 %v1011, %v1007
        %v1252 = vpack.c.b16 %v1012, %v1008
        %v1253 = vpack.c.b16 %v1013, %v1009
        %v1254 = vpack.c.b16 %v1014, %v1010
        %v1255 = vpack.c.b16 %v1019, %v1015
        %v1256 = vpack.c.b16 %v1020, %v1016
        %v1257 = vpack.c.b16 %v1021, %v1017
        %v1258 = vpack.c.b16 %v1022, %v1018
        %v1259 = vpack.c.b16 %v1027, %v1023
        %v1260 = vpack.c.b16 %v1028, %v1024
        %v1261 = vpack.c.b16 %v1029, %v1025
        %v1262 = vpack.c.b16 %v1030, %v1026
        %v1263 = vpack.c.b16 %v1035, %v1031
        %v1264 = vpack.c.b16 %v1036, %v1032
        %v1265 = vpack.c.b16 %v1037, %v1033
        %v1266 = vpack.c.b16 %v1038, %v1034
        %v1267 = vpack.c.b16 %v1043, %v1039
        %v1268 = vpack.c.b16 %v1044, %v1040
        %v1269 = vpack.c.b16 %v1045, %v1041
        %v1270 = vpack.c.b16 %v1046, %v1042
        %v1271 = vpack.c.b16 %v1051, %v1047
        %v1272 = vpack.c.b16 %v1052, %v1048
        %v1273 = vpack.c.b16 %v1053, %v1049
        %v1274 = vpack.c.b16 %v1054, %v1050
        %v1275 = vpack.c.b16 %v1059, %v1055
        %v1276 = vpack.c.b16 %v1060, %v1056
        %v1277 = vpack.c.b16 %v1061, %v1057
        %v1278 = vpack.c.b16 %v1062, %v1058
        %v1279 = vpack.c.b16 %v1067, %v1063
        %v1280 = vpack.c.b16 %v1068, %v1064
        %v1281 = vpack.c.b16 %v1069, %v1065
        %v1282 = vpack.c.b16 %v1070, %v1066
        %v1283 = vpack.c.b16 %v1075, %v1071
        %v1284 = vpack.c.b16 %v1076, %v1072
        %v1285 = vpack.c.b16 %v1077, %v1073
        %v1286 = vpack.c.b16 %v1078, %v1074
        %v1287 = vpack.c.b16 %v1083, %v1079
        %v1288 = vpack.c.b16 %v1084, %v1080
        %v1289 = vpack.c.b16 %v1085, %v1081
        %v1290 = vpack.c.b16 %v1086, %v1082
        %v1291 = vpack.c.b16 %v1091, %v1087
        %v1292 = vpack.c.b16 %v1092, %v1088
        %v1293 = vpack.c.b16 %v1093, %v1089
        %v1294 = vpack.c.b16 %v1094, %v1090
        %v1295 = vpack.c.b16 %v1099, %v1095
        %v1296 = vpack.c.b16 %v1100, %v1096
        %v1297 = vpack.c.b16 %v1101, %v1097
        %v1298 = vpack.c.b16 %v1102, %v1098
        %vm1495 = vcmask 130048
        %v1497 = vsel %vm1495, %v296, 0
        %1499 = vmatprep.subr.bf16.mxu0 %v1104
        %1500 = vmatpush1.bf16.msra.mxu0 %v1103
        %1501 = vmatprep.subr.bf16.mxu0 %v1108
        %1502 = vmatpush1.bf16.msra.mxu0 %v1107
        %1503 = vmatprep.subr.bf16.mxu0 %v1112
        %1504 = vmatpush1.bf16.msra.mxu0 %v1111
        %1505 = vmatprep.subr.bf16.mxu0 %v1116
        %1506 = vmatpush1.bf16.msra.mxu0 %v1115
        %1507 = vmatprep.subr.bf16.mxu0 %v1120
        %1508 = vmatpush1.bf16.msra.mxu0 %v1119
        %1509 = vmatprep.subr.bf16.mxu0 %v1124
        %1510 = vmatpush1.bf16.msra.mxu0 %v1123
        %1511 = vmatprep.subr.bf16.mxu0 %v1128
        %1512 = vmatpush1.bf16.msra.mxu0 %v1127
        %1513 = vmatprep.subr.bf16.mxu0 %v1132
        %1514 = vmatpush1.bf16.msra.mxu0 %v1131
        %1515 = vmatprep.subr.bf16.mxu0 %v1136
        %1516 = vmatpush1.bf16.msra.mxu0 %v1135
        %1517 = vmatprep.subr.bf16.mxu0 %v1140
        %1518 = vmatpush1.bf16.msra.mxu0 %v1139
        %1519 = vmatprep.subr.bf16.mxu0 %v1144
        %1520 = vmatpush1.bf16.msra.mxu0 %v1143
        %1521 = vmatprep.subr.bf16.mxu0 %v1148
        %1522 = vmatpush1.bf16.msra.mxu0 %v1147
        %1523 = vmatprep.subr.bf16.mxu0 %v1152
        %1524 = vmatpush1.bf16.msra.mxu0 %v1151
        %1525 = vmatprep.subr.bf16.mxu0 %v1156
        %1526 = vmatpush1.bf16.msra.mxu0 %v1155
        %1527 = vmatprep.subr.bf16.mxu0 %v1160
        %1528 = vmatpush1.bf16.msra.mxu0 %v1159
        %1529 = vmatprep.subr.bf16.mxu0 %v1164
        %1530 = vmatpush1.bf16.msra.mxu0 %v1163
        %1531 = vmatprep.mubr.bf16.mxu0 %v291
        %1532 = vmatmul.mubr.bf16.gmra.mrb[0].mxu0 %v290
        %v1533 = vpop.f32.mrb[0].mxu0
        %v1534 = vadd.f32 %v498, %v1533
        %v1535 = vpop.f32.mrb[0].mxu0
        %v1536 = vadd.f32 %v502, %v1535
        %v1537 = vpop.f32.mrb[0].mxu0
        %v1538 = vadd.f32 %v498, %v1537
        %v1539 = vpop.f32.mrb[0].mxu0
        %v1540 = vadd.f32 %v502, %v1539
        %1541 = vdwg.mxu0
        %1542 = vmatprep.subr.bf16.mxu0 %v1168
        %1543 = vmatpush1.bf16.msra.mxu0 %v1167
        %1544 = vmatprep.subr.bf16.mxu0 %v1172
        %1545 = vmatpush1.bf16.msra.mxu0 %v1171
        %1546 = vmatprep.subr.bf16.mxu0 %v1176
        %1547 = vmatpush1.bf16.msra.mxu0 %v1175
        %1548 = vmatprep.subr.bf16.mxu0 %v1180
        %1549 = vmatpush1.bf16.msra.mxu0 %v1179
        %1550 = vmatprep.subr.bf16.mxu0 %v1184
        %1551 = vmatpush1.bf16.msra.mxu0 %v1183
        %1552 = vmatprep.subr.bf16.mxu0 %v1188
        %1553 = vmatpush1.bf16.msra.mxu0 %v1187
        %1554 = vmatprep.subr.bf16.mxu0 %v1192
        %1555 = vmatpush1.bf16.msra.mxu0 %v1191
        %1556 = vmatprep.subr.bf16.mxu0 %v1196
        %1557 = vmatpush1.bf16.msra.mxu0 %v1195
        %1558 = vmatprep.subr.bf16.mxu0 %v1200
        %1559 = vmatpush1.bf16.msra.mxu0 %v1199
        %1560 = vmatprep.subr.bf16.mxu0 %v1204
        %1561 = vmatpush1.bf16.msra.mxu0 %v1203
        %1562 = vmatprep.subr.bf16.mxu0 %v1208
        %1563 = vmatpush1.bf16.msra.mxu0 %v1207
        %1564 = vmatprep.subr.bf16.mxu0 %v1212
        %1565 = vmatpush1.bf16.msra.mxu0 %v1211
        %1566 = vmatprep.subr.bf16.mxu0 %v1216
        %1567 = vmatpush1.bf16.msra.mxu0 %v1215
        %1568 = vmatprep.subr.bf16.mxu0 %v1220
        %1569 = vmatpush1.bf16.msra.mxu0 %v1219
        %1570 = vmatprep.subr.bf16.mxu0 %v1224
        %1571 = vmatpush1.bf16.msra.mxu0 %v1223
        %1572 = vmatprep.subr.bf16.mxu0 %v1228
        %1573 = vmatpush1.bf16.msra.mxu0 %v1227
        %1574 = vmatprep.mubr.bf16.mxu0 %v293
        %1575 = vmatmul.mubr.bf16.gmra.mrb[0].mxu0 %v292
        %v1576 = vpop.f32.mrb[0].mxu0
        %v1577 = vadd.f32 %v1534, %v1576
        %v1578 = vpop.f32.mrb[0].mxu0
        %v1579 = vadd.f32 %v1536, %v1578
        %v1580 = vpop.f32.mrb[0].mxu0
        %v1581 = vadd.f32 %v1538, %v1580
        %v1582 = vpop.f32.mrb[0].mxu0
        %v1583 = vadd.f32 %v1540, %v1582
        %1584 = vdwg.mxu0
        %1585 = vmatprep.subr.bf16.mxu0 %v1232
        %1586 = vmatpush1.bf16.msra.mxu0 %v1231
        %1587 = vmatprep.subr.bf16.mxu0 %v1236
        %1588 = vmatpush1.bf16.msra.mxu0 %v1235
        %1589 = vmatprep.subr.bf16.mxu0 %v1240
        %1590 = vmatpush1.bf16.msra.mxu0 %v1239
        %1591 = vmatprep.subr.bf16.mxu0 %v1244
        %1592 = vmatpush1.bf16.msra.mxu0 %v1243
        %1593 = vmatprep.subr.bf16.mxu0 %v1248
        %1594 = vmatpush1.bf16.msra.mxu0 %v1247
        %1595 = vmatprep.subr.bf16.mxu0 %v1252
        %1596 = vmatpush1.bf16.msra.mxu0 %v1251
        %1597 = vmatprep.subr.bf16.mxu0 %v1256
        %1598 = vmatpush1.bf16.msra.mxu0 %v1255
        %1599 = vmatprep.subr.bf16.mxu0 %v1260
        %1600 = vmatpush1.bf16.msra.mxu0 %v1259
        %1601 = vmatprep.subr.bf16.mxu0 %v1264
        %1602 = vmatpush1.bf16.msra.mxu0 %v1263
        %1603 = vmatprep.subr.bf16.mxu0 %v1268
        %1604 = vmatpush1.bf16.msra.mxu0 %v1267
        %1605 = vmatprep.subr.bf16.mxu0 %v1272
        %1606 = vmatpush1.bf16.msra.mxu0 %v1271
        %1607 = vmatprep.subr.bf16.mxu0 %v1276
        %1608 = vmatpush1.bf16.msra.mxu0 %v1275
        %1609 = vmatprep.subr.bf16.mxu0 %v1280
        %1610 = vmatpush1.bf16.msra.mxu0 %v1279
        %1611 = vmatprep.subr.bf16.mxu0 %v1284
        %1612 = vmatpush1.bf16.msra.mxu0 %v1283
        %1613 = vmatprep.subr.bf16.mxu0 %v1288
        %1614 = vmatpush1.bf16.msra.mxu0 %v1287
        %1615 = vmatprep.subr.bf16.mxu0 %v1292
        %1616 = vmatpush1.bf16.msra.mxu0 %v1291
        %1617 = vmatprep.mubr.bf16.mxu0 %v295
        %1618 = vmatmul.mubr.bf16.gmra.mrb[0].mxu0 %v294
        %v1619 = vpop.f32.mrb[0].mxu0
        %v1620 = vadd.f32 %v1577, %v1619
        %v1621 = vpop.f32.mrb[0].mxu0
        %v1622 = vadd.f32 %v1579, %v1621
        %v1623 = vpop.f32.mrb[0].mxu0
        %v1624 = vadd.f32 %v1581, %v1623
        %v1625 = vpop.f32.mrb[0].mxu0
        %v1626 = vadd.f32 %v1583, %v1625
        %1627 = vdwg.mxu0
        %1628 = vmatprep.subr.bf16.mxu0 %v1296
        %1629 = vmatpush1.bf16.msra.mxu0 %v1295
        %1630 = vmatprep.subr.bf16.mxu0 0
        %1631 = vmatpush1.bf16.msra.mxu0 0
        %1632 = vmatprep.subr.bf16.mxu0 0
        %1633 = vmatpush1.bf16.msra.mxu0 0
        %1634 = vmatprep.subr.bf16.mxu0 0
        %1635 = vmatpush1.bf16.msra.mxu0 0
        %1636 = vmatprep.subr.bf16.mxu0 0
        %1637 = vmatpush1.bf16.msra.mxu0 0
        %1638 = vmatprep.subr.bf16.mxu0 0
        %1639 = vmatpush1.bf16.msra.mxu0 0
        %1640 = vmatprep.subr.bf16.mxu0 0
        %1641 = vmatpush1.bf16.msra.mxu0 0
        %1642 = vmatprep.subr.bf16.mxu0 0
        %1643 = vmatpush1.bf16.msra.mxu0 0
        %1644 = vmatprep.subr.bf16.mxu0 0
        %1645 = vmatpush1.bf16.msra.mxu0 0
        %1646 = vmatprep.subr.bf16.mxu0 0
        %1647 = vmatpush1.bf16.msra.mxu0 0
        %1648 = vmatprep.subr.bf16.mxu0 0
        %1649 = vmatpush1.bf16.msra.mxu0 0
        %1650 = vmatprep.subr.bf16.mxu0 0
        %1651 = vmatpush1.bf16.msra.mxu0 0
        %1652 = vmatprep.subr.bf16.mxu0 0
        %1653 = vmatpush1.bf16.msra.mxu0 0
        %1654 = vmatprep.subr.bf16.mxu0 0
        %1655 = vmatpush1.bf16.msra.mxu0 0
        %1656 = vmatprep.subr.bf16.mxu0 0
        %1657 = vmatpush1.bf16.msra.mxu0 0
        %1658 = vmatprep.subr.bf16.mxu0 0
        %1659 = vmatpush1.bf16.msra.mxu0 0
        %1660 = vmatprep.mubr.bf16.mxu0 0
        %1661 = vmatmul.mubr.bf16.gmra.mrb[0].mxu0 %v1497
        %v1662 = vpop.f32.mrb[0].mxu0
        %v1663 = vadd.f32 %v1620, %v1662
        %v1664 = vpop.f32.mrb[0].mxu0
        %v1665 = vadd.f32 %v1622, %v1664
        %v1666 = vpop.f32.mrb[0].mxu0
        %v1667 = vadd.f32 %v1624, %v1666
        %v1668 = vpop.f32.mrb[0].mxu0
        %v1669 = vadd.f32 %v1626, %v1668
        %1670 = vdwg.mxu0
        %1671 = vmatprep.subr.bf16.mxu0 %v1106
        %1672 = vmatpush1.bf16.msra.mxu0 %v1105
        %1673 = vmatprep.subr.bf16.mxu0 %v1110
        %1674 = vmatpush1.bf16.msra.mxu0 %v1109
        %1675 = vmatprep.subr.bf16.mxu0 %v1114
        %1676 = vmatpush1.bf16.msra.mxu0 %v1113
        %1677 = vmatprep.subr.bf16.mxu0 %v1118
        %1678 = vmatpush1.bf16.msra.mxu0 %v1117
        %1679 = vmatprep.subr.bf16.mxu0 %v1122
        %1680 = vmatpush1.bf16.msra.mxu0 %v1121
        %1681 = vmatprep.subr.bf16.mxu0 %v1126
        %1682 = vmatpush1.bf16.msra.mxu0 %v1125
        %1683 = vmatprep.subr.bf16.mxu0 %v1130
        %1684 = vmatpush1.bf16.msra.mxu0 %v1129
        %1685 = vmatprep.subr.bf16.mxu0 %v1134
        %1686 = vmatpush1.bf16.msra.mxu0 %v1133
        %1687 = vmatprep.subr.bf16.mxu0 %v1138
        %1688 = vmatpush1.bf16.msra.mxu0 %v1137
        %1689 = vmatprep.subr.bf16.mxu0 %v1142
        %1690 = vmatpush1.bf16.msra.mxu0 %v1141
        %1691 = vmatprep.subr.bf16.mxu0 %v1146
        %1692 = vmatpush1.bf16.msra.mxu0 %v1145
        %1693 = vmatprep.subr.bf16.mxu0 %v1150
        %1694 = vmatpush1.bf16.msra.mxu0 %v1149
        %1695 = vmatprep.subr.bf16.mxu0 %v1154
        %1696 = vmatpush1.bf16.msra.mxu0 %v1153
        %1697 = vmatprep.subr.bf16.mxu0 %v1158
        %1698 = vmatpush1.bf16.msra.mxu0 %v1157
        %1699 = vmatprep.subr.bf16.mxu0 %v1162
        %1700 = vmatpush1.bf16.msra.mxu0 %v1161
        %1701 = vmatprep.subr.bf16.mxu0 %v1166
        %1702 = vmatpush1.bf16.msra.mxu0 %v1165
        %1703 = vmatprep.mubr.bf16.mxu0 %v291
        %1704 = vmatmul.mubr.bf16.gmra.mrb[0].mxu0 %v290
        %v1705 = vpop.f32.mrb[0].mxu0
        %v1706 = vadd.f32 %v506, %v1705
        %v1707 = vpop.f32.mrb[0].mxu0
        %v1708 = vadd.f32 %v510, %v1707
        %v1709 = vpop.f32.mrb[0].mxu0
        %v1710 = vadd.f32 %v506, %v1709
        %v1711 = vpop.f32.mrb[0].mxu0
        %v1712 = vadd.f32 %v510, %v1711
        %1713 = vdwg.mxu0
        %1714 = vmatprep.subr.bf16.mxu0 %v1170
        %1715 = vmatpush1.bf16.msra.mxu0 %v1169
        %1716 = vmatprep.subr.bf16.mxu0 %v1174
        %1717 = vmatpush1.bf16.msra.mxu0 %v1173
        %1718 = vmatprep.subr.bf16.mxu0 %v1178
        %1719 = vmatpush1.bf16.msra.mxu0 %v1177
        %1720 = vmatprep.subr.bf16.mxu0 %v1182
        %1721 = vmatpush1.bf16.msra.mxu0 %v1181
        %1722 = vmatprep.subr.bf16.mxu0 %v1186
        %1723 = vmatpush1.bf16.msra.mxu0 %v1185
        %1724 = vmatprep.subr.bf16.mxu0 %v1190
        %1725 = vmatpush1.bf16.msra.mxu0 %v1189
        %1726 = vmatprep.subr.bf16.mxu0 %v1194
        %1727 = vmatpush1.bf16.msra.mxu0 %v1193
        %1728 = vmatprep.subr.bf16.mxu0 %v1198
        %1729 = vmatpush1.bf16.msra.mxu0 %v1197
        %1730 = vmatprep.subr.bf16.mxu0 %v1202
        %1731 = vmatpush1.bf16.msra.mxu0 %v1201
        %1732 = vmatprep.subr.bf16.mxu0 %v1206
        %1733 = vmatpush1.bf16.msra.mxu0 %v1205
        %1734 = vmatprep.subr.bf16.mxu0 %v1210
        %1735 = vmatpush1.bf16.msra.mxu0 %v1209
        %1736 = vmatprep.subr.bf16.mxu0 %v1214
        %1737 = vmatpush1.bf16.msra.mxu0 %v1213
        %1738 = vmatprep.subr.bf16.mxu0 %v1218
        %1739 = vmatpush1.bf16.msra.mxu0 %v1217
        %1740 = vmatprep.subr.bf16.mxu0 %v1222
        %1741 = vmatpush1.bf16.msra.mxu0 %v1221
        %1742 = vmatprep.subr.bf16.mxu0 %v1226
        %1743 = vmatpush1.bf16.msra.mxu0 %v1225
        %1744 = vmatprep.subr.bf16.mxu0 %v1230
        %1745 = vmatpush1.bf16.msra.mxu0 %v1229
        %1746 = vmatprep.mubr.bf16.mxu0 %v293
        %1747 = vmatmul.mubr.bf16.gmra.mrb[0].mxu0 %v292
        %v1748 = vpop.f32.mrb[0].mxu0
        %v1749 = vadd.f32 %v1706, %v1748
        %v1750 = vpop.f32.mrb[0].mxu0
        %v1751 = vadd.f32 %v1708, %v1750
        %v1752 = vpop.f32.mrb[0].mxu0
        %v1753 = vadd.f32 %v1710, %v1752
        %v1754 = vpop.f32.mrb[0].mxu0
        %v1755 = vadd.f32 %v1712, %v1754
        %1756 = vdwg.mxu0
        %1757 = vmatprep.subr.bf16.mxu0 %v1234
        %1758 = vmatpush1.bf16.msra.mxu0 %v1233
        %1759 = vmatprep.subr.bf16.mxu0 %v1238
        %1760 = vmatpush1.bf16.msra.mxu0 %v1237
        %1761 = vmatprep.subr.bf16.mxu0 %v1242
        %1762 = vmatpush1.bf16.msra.mxu0 %v1241
        %1763 = vmatprep.subr.bf16.mxu0 %v1246
        %1764 = vmatpush1.bf16.msra.mxu0 %v1245
        %1765 = vmatprep.subr.bf16.mxu0 %v1250
        %1766 = vmatpush1.bf16.msra.mxu0 %v1249
        %1767 = vmatprep.subr.bf16.mxu0 %v1254
        %1768 = vmatpush1.bf16.msra.mxu0 %v1253
        %1769 = vmatprep.subr.bf16.mxu0 %v1258
        %1770 = vmatpush1.bf16.msra.mxu0 %v1257
        %1771 = vmatprep.subr.bf16.mxu0 %v1262
        %1772 = vmatpush1.bf16.msra.mxu0 %v1261
        %1773 = vmatprep.subr.bf16.mxu0 %v1266
        %1774 = vmatpush1.bf16.msra.mxu0 %v1265
        %1775 = vmatprep.subr.bf16.mxu0 %v1270
        %1776 = vmatpush1.bf16.msra.mxu0 %v1269
        %1777 = vmatprep.subr.bf16.mxu0 %v1274
        %1778 = vmatpush1.bf16.msra.mxu0 %v1273
        %1779 = vmatprep.subr.bf16.mxu0 %v1278
        %1780 = vmatpush1.bf16.msra.mxu0 %v1277
        %1781 = vmatprep.subr.bf16.mxu0 %v1282
        %1782 = vmatpush1.bf16.msra.mxu0 %v1281
        %1783 = vmatprep.subr.bf16.mxu0 %v1286
        %1784 = vmatpush1.bf16.msra.mxu0 %v1285
        %1785 = vmatprep.subr.bf16.mxu0 %v1290
        %1786 = vmatpush1.bf16.msra.mxu0 %v1289
        %1787 = vmatprep.subr.bf16.mxu0 %v1294
        %1788 = vmatpush1.bf16.msra.mxu0 %v1293
        %1789 = vmatprep.mubr.bf16.mxu0 %v295
        %1790 = vmatmul.mubr.bf16.gmra.mrb[0].mxu0 %v294
        %v1791 = vpop.f32.mrb[0].mxu0
        %v1792 = vadd.f32 %v1749, %v1791
        %v1793 = vpop.f32.mrb[0].mxu0
        %v1794 = vadd.f32 %v1751, %v1793
        %v1795 = vpop.f32.mrb[0].mxu0
        %v1796 = vadd.f32 %v1753, %v1795
        %v1797 = vpop.f32.mrb[0].mxu0
        %v1798 = vadd.f32 %v1755, %v1797
        %1799 = vdwg.mxu0
        %1800 = vmatprep.subr.bf16.mxu0 %v1298
        %1801 = vmatpush1.bf16.msra.mxu0 %v1297
        %1802 = vmatprep.subr.bf16.mxu0 0
        %1803 = vmatpush1.bf16.msra.mxu0 0
        %1804 = vmatprep.subr.bf16.mxu0 0
        %1805 = vmatpush1.bf16.msra.mxu0 0
        %1806 = vmatprep.subr.bf16.mxu0 0
        %1807 = vmatpush1.bf16.msra.mxu0 0
        %1808 = vmatprep.subr.bf16.mxu0 0
        %1809 = vmatpush1.bf16.msra.mxu0 0
        %1810 = vmatprep.subr.bf16.mxu0 0
        %1811 = vmatpush1.bf16.msra.mxu0 0
        %1812 = vmatprep.subr.bf16.mxu0 0
        %1813 = vmatpush1.bf16.msra.mxu0 0
        %1814 = vmatprep.subr.bf16.mxu0 0
        %1815 = vmatpush1.bf16.msra.mxu0 0
        %1816 = vmatprep.subr.bf16.mxu0 0
        %1817 = vmatpush1.bf16.msra.mxu0 0
        %1818 = vmatprep.subr.bf16.mxu0 0
        %1819 = vmatpush1.bf16.msra.mxu0 0
        %1820 = vmatprep.subr.bf16.mxu0 0
        %1821 = vmatpush1.bf16.msra.mxu0 0
        %1822 = vmatprep.subr.bf16.mxu0 0
        %1823 = vmatpush1.bf16.msra.mxu0 0
        %1824 = vmatprep.subr.bf16.mxu0 0
        %1825 = vmatpush1.bf16.msra.mxu0 0
        %1826 = vmatprep.subr.bf16.mxu0 0
        %1827 = vmatpush1.bf16.msra.mxu0 0
        %1828 = vmatprep.subr.bf16.mxu0 0
        %1829 = vmatpush1.bf16.msra.mxu0 0
        %1830 = vmatprep.subr.bf16.mxu0 0
        %1831 = vmatpush1.bf16.msra.mxu0 0
        %1832 = vmatprep.mubr.bf16.mxu0 0
        %1833 = vmatmul.mubr.bf16.gmra.mrb[0].mxu0 %v1497
        %v1834 = vpop.f32.mrb[0].mxu0
        %v1835 = vadd.f32 %v1792, %v1834
        %v1836 = vpop.f32.mrb[0].mxu0
        %v1837 = vadd.f32 %v1794, %v1836
        %v1838 = vpop.f32.mrb[0].mxu0
        %v1839 = vadd.f32 %v1796, %v1838
        %v1840 = vpop.f32.mrb[0].mxu0
        %v1841 = vadd.f32 %v1798, %v1840
        %1842 = vdwg.mxu0
        %v1843 = vmax.f32 %v1663, 0.0
        %v1844 = vmax.f32 %v1665, 0.0
        %v1845 = vmax.f32 %v1835, 0.0
        %v1846 = vmax.f32 %v1837, 0.0
        %v1847 = vmax.f32 %v1667, 0.0
        %v1848 = vmax.f32 %v1669, 0.0
        %v1849 = vmax.f32 %v1839, 0.0
        %v1850 = vmax.f32 %v1841, 0.0
        %v1851 = vpack.c.bf16 %v1847, %v1843
        %v1852 = vpack.c.bf16 %v1848, %v1844
        %v1853 = vpack.c.bf16 %v1849, %v1845
        %v1854 = vpack.c.bf16 %v1850, %v1846
        %v1855 = vld [vmem:[#allocation7] sm:$0xff]
        %v1856 = vld [vmem:[#allocation7 + $0x8] sm:$0xff]
        %v1857 = vld [vmem:[#allocation7 + $0x10] sm:$0xff]
        %v1858 = vld [vmem:[#allocation7 + $0x18] sm:$0xff]
        %v1859 = vld [vmem:[#allocation7 + $0x20] sm:$0xff]
        %v1860 = vld [vmem:[#allocation7 + $0x28] sm:$0xff]
        %v1861 = vld [vmem:[#allocation7 + $0x30] sm:$0xff]
        %v1862 = vld [vmem:[#allocation7 + $0x38] sm:$0xff]
        %v1863 = vld [vmem:[#allocation7 + $0x40] sm:$0xff]
        %v1864 = vld [vmem:[#allocation7 + $0x48] sm:$0xff]
        %v1865 = vld [vmem:[#allocation7 + $0x50] sm:$0xff]
        %v1866 = vld [vmem:[#allocation7 + $0x58] sm:$0xff]
        %v1867 = vld [vmem:[#allocation7 + $0x60] sm:$0xff]
        %v1868 = vld [vmem:[#allocation7 + $0x68] sm:$0xff]
        %v1869 = vld [vmem:[#allocation7 + $0x70] sm:$0xff]
        %v1870 = vld [vmem:[#allocation7 + $0x78] sm:$0xff]
        %v1871 = vld [vmem:[#allocation7 + $0x80] sm:$0xff]
        %v1872 = vld [vmem:[#allocation7 + $0x88] sm:$0xff]
        %v1873 = vld [vmem:[#allocation7 + $0x90] sm:$0xff]
        %v1874 = vld [vmem:[#allocation7 + $0x98] sm:$0xff]
        %v1875 = vld [vmem:[#allocation7 + $0xa0] sm:$0xff]
        %v1876 = vld [vmem:[#allocation7 + $0xa8] sm:$0xff]
        %v1877 = vld [vmem:[#allocation7 + $0xb0] sm:$0xff]
        %v1878 = vld [vmem:[#allocation7 + $0xb8] sm:$0xff]
        %v1879 = vld [vmem:[#allocation7 + $0xc0] sm:$0xff]
        %v1880 = vld [vmem:[#allocation7 + $0xc8] sm:$0xff]
        %v1881 = vld [vmem:[#allocation7 + $0xd0] sm:$0xff]
        %v1882 = vld [vmem:[#allocation7 + $0xd8] sm:$0xff]
        %v1883 = vld [vmem:[#allocation7 + $0xe0] sm:$0xff]
        %v1884 = vld [vmem:[#allocation7 + $0xe8] sm:$0xff]
        %v1885 = vld [vmem:[#allocation7 + $0xf0] sm:$0xff]
        %v1886 = vld [vmem:[#allocation7 + $0xf8] sm:$0xff]
        %v1887 = vld [vmem:[#allocation7 + $0x100] sm:$0xff]
        %v1888 = vld [vmem:[#allocation7 + $0x108] sm:$0xff]
        %v1889 = vld [vmem:[#allocation7 + $0x110] sm:$0xff]
        %v1890 = vld [vmem:[#allocation7 + $0x118] sm:$0xff]
        %v1891 = vld [vmem:[#allocation7 + $0x120] sm:$0xff]
        %v1892 = vld [vmem:[#allocation7 + $0x128] sm:$0xff]
        %v1893 = vld [vmem:[#allocation7 + $0x130] sm:$0xff]
        %v1894 = vld [vmem:[#allocation7 + $0x138] sm:$0xff]
        %v1895 = vld [vmem:[#allocation7 + $0x140] sm:$0xff]
        %v1896 = vld [vmem:[#allocation7 + $0x148] sm:$0xff]
        %v1897 = vld [vmem:[#allocation7 + $0x150] sm:$0xff]
        %v1898 = vld [vmem:[#allocation7 + $0x158] sm:$0xff]
        %v1899 = vld [vmem:[#allocation7 + $0x160] sm:$0xff]
        %v1900 = vld [vmem:[#allocation7 + $0x168] sm:$0xff]
        %v1901 = vld [vmem:[#allocation7 + $0x170] sm:$0xff]
        %v1902 = vld [vmem:[#allocation7 + $0x178] sm:$0xff]
        %v1903 = vld [vmem:[#allocation7 + $0x180] sm:$0xff]
        %v1904 = vld [vmem:[#allocation7 + $0x188] sm:$0xff]
        %v1905 = vld [vmem:[#allocation7 + $0x190] sm:$0xff]
        %v1906 = vld [vmem:[#allocation7 + $0x198] sm:$0xff]
        %v1907 = vld [vmem:[#allocation7 + $0x1a0] sm:$0xff]
        %v1908 = vld [vmem:[#allocation7 + $0x1a8] sm:$0xff]
        %v1909 = vld [vmem:[#allocation7 + $0x1b0] sm:$0xff]
        %v1910 = vld [vmem:[#allocation7 + $0x1b8] sm:$0xff]
        %v1911 = vld [vmem:[#allocation7 + $0x1c0] sm:$0xff]
        %v1912 = vld [vmem:[#allocation7 + $0x1c8] sm:$0xff]
        %v1913 = vld [vmem:[#allocation7 + $0x1d0] sm:$0xff]
        %v1914 = vld [vmem:[#allocation7 + $0x1d8] sm:$0xff]
        %v1915 = vld [vmem:[#allocation7 + $0x1e0] sm:$0xff]
        %v1916 = vld [vmem:[#allocation7 + $0x1e8] sm:$0xff]
        %v1917 = vld [vmem:[#allocation7 + $0x1f0] sm:$0xff]
        %v1918 = vld [vmem:[#allocation7 + $0x1f8] sm:$0xff]
        %v1919 = vld [vmem:[#allocation7 + $0x200] sm:$0xff]
        %v1920 = vld [vmem:[#allocation7 + $0x208] sm:$0xff]
        %v1921 = vld [vmem:[#allocation7 + $0x210] sm:$0xff]
        %v1922 = vld [vmem:[#allocation7 + $0x218] sm:$0xff]
        %v1923 = vld [vmem:[#allocation7 + $0x220] sm:$0xff]
        %v1924 = vld [vmem:[#allocation7 + $0x228] sm:$0xff]
        %v1925 = vld [vmem:[#allocation7 + $0x230] sm:$0xff]
        %v1926 = vld [vmem:[#allocation7 + $0x238] sm:$0xff]
        %v1927 = vld [vmem:[#allocation7 + $0x240] sm:$0xff]
        %v1928 = vld [vmem:[#allocation7 + $0x248] sm:$0xff]
        %v1929 = vld [vmem:[#allocation7 + $0x250] sm:$0xff]
        %v1930 = vld [vmem:[#allocation7 + $0x258] sm:$0xff]
        %v1931 = vld [vmem:[#allocation7 + $0x260] sm:$0xff]
        %v1932 = vld [vmem:[#allocation7 + $0x268] sm:$0xff]
        %v1933 = vld [vmem:[#allocation7 + $0x270] sm:$0xff]
        %v1934 = vld [vmem:[#allocation7 + $0x278] sm:$0xff]
        %v1935 = vld [vmem:[#allocation7 + $0x280] sm:$0xff]
        %v1936 = vld [vmem:[#allocation7 + $0x288] sm:$0xff]
        %v1937 = vld [vmem:[#allocation7 + $0x290] sm:$0xff]
        %v1938 = vld [vmem:[#allocation7 + $0x298] sm:$0xff]
        %v1939 = vld [vmem:[#allocation7 + $0x2a0] sm:$0xff]
        %v1940 = vld [vmem:[#allocation7 + $0x2a8] sm:$0xff]
        %v1941 = vld [vmem:[#allocation7 + $0x2b0] sm:$0xff]
        %v1942 = vld [vmem:[#allocation7 + $0x2b8] sm:$0xff]
        %v1943 = vld [vmem:[#allocation7 + $0x2c0] sm:$0xff]
        %v1944 = vld [vmem:[#allocation7 + $0x2c8] sm:$0xff]
        %v1945 = vld [vmem:[#allocation7 + $0x2d0] sm:$0xff]
        %v1946 = vld [vmem:[#allocation7 + $0x2d8] sm:$0xff]
        %v1947 = vld [vmem:[#allocation7 + $0x2e0] sm:$0xff]
        %v1948 = vld [vmem:[#allocation7 + $0x2e8] sm:$0xff]
        %v1949 = vld [vmem:[#allocation7 + $0x2f0] sm:$0xff]
        %v1950 = vld [vmem:[#allocation7 + $0x2f8] sm:$0xff]
        %v1951 = vld [vmem:[#allocation7 + $0x300] sm:$0xff]
        %v1952 = vld [vmem:[#allocation7 + $0x308] sm:$0xff]
        %v1953 = vld [vmem:[#allocation7 + $0x310] sm:$0xff]
        %v1954 = vld [vmem:[#allocation7 + $0x318] sm:$0xff]
        %v1955 = vld [vmem:[#allocation7 + $0x320] sm:$0xff]
        %v1956 = vld [vmem:[#allocation7 + $0x328] sm:$0xff]
        %v1957 = vld [vmem:[#allocation7 + $0x330] sm:$0xff]
        %v1958 = vld [vmem:[#allocation7 + $0x338] sm:$0xff]
        %v1959 = vld [vmem:[#allocation7 + $0x340] sm:$0xff]
        %v1960 = vld [vmem:[#allocation7 + $0x348] sm:$0xff]
        %v1961 = vld [vmem:[#allocation7 + $0x350] sm:$0xff]
        %v1962 = vld [vmem:[#allocation7 + $0x358] sm:$0xff]
        %v1963 = vld [vmem:[#allocation7 + $0x360] sm:$0xff]
        %v1964 = vld [vmem:[#allocation7 + $0x368] sm:$0xff]
        %v1965 = vld [vmem:[#allocation7 + $0x370] sm:$0xff]
        %v1966 = vld [vmem:[#allocation7 + $0x378] sm:$0xff]
        %v1967 = vld [vmem:[#allocation7 + $0x380] sm:$0xff]
        %v1968 = vld [vmem:[#allocation7 + $0x388] sm:$0xff]
        %v1969 = vld [vmem:[#allocation7 + $0x390] sm:$0xff]
        %v1970 = vld [vmem:[#allocation7 + $0x398] sm:$0xff]
        %v1971 = vld [vmem:[#allocation7 + $0x3a0] sm:$0xff]
        %v1972 = vld [vmem:[#allocation7 + $0x3a8] sm:$0xff]
        %v1973 = vld [vmem:[#allocation7 + $0x3b0] sm:$0xff]
        %v1974 = vld [vmem:[#allocation7 + $0x3b8] sm:$0xff]
        %v1975 = vld [vmem:[#allocation7 + $0x3c0] sm:$0xff]
        %v1976 = vld [vmem:[#allocation7 + $0x3c8] sm:$0xff]
        %v1977 = vld [vmem:[#allocation7 + $0x3d0] sm:$0xff]
        %v1978 = vld [vmem:[#allocation7 + $0x3d8] sm:$0xff]
        %v1979 = vld [vmem:[#allocation7 + $0x3e0] sm:$0xff]
        %v1980 = vld [vmem:[#allocation7 + $0x3e8] sm:$0xff]
        %v1981 = vld [vmem:[#allocation7 + $0x3f0] sm:$0xff]
        %v1982 = vld [vmem:[#allocation7 + $0x3f8] sm:$0xff]
        %v1983 = vld [vmem:[%s4] sm:$0xf]
        %v1985 = vlaneseq
        %v1986 = vshrl.u32 %v1985, 7
        %v1987 = vsub.s32 0, %v1986
        %v1988 = vrot.slane %v1983, %v1987
        %v1989 = vlaneseq
        %v1990 = vshrl.u32 %v1989, 7
        %v1991 = vsub.s32 1, %v1990
        %v1992 = vrot.slane %v1983, %v1991
        %v1993 = vlaneseq
        %v1994 = vshrl.u32 %v1993, 7
        %v1995 = vsub.s32 2, %v1994
        %v1996 = vrot.slane %v1983, %v1995
        %v1997 = vlaneseq
        %v1998 = vshrl.u32 %v1997, 7
        %v1999 = vsub.s32 3, %v1998
        %v2000 = vrot.slane %v1983, %v1999
        %v2133 = vunpack.c.l.b16 %v1855
        %v2134 = vunpack.c.h.b16 %v1855
        %v2135 = vunpack.c.l.b16 %v1856
        %v2136 = vunpack.c.h.b16 %v1856
        %v2137 = vunpack.c.l.b16 %v1857
        %v2138 = vunpack.c.h.b16 %v1857
        %v2139 = vunpack.c.l.b16 %v1858
        %v2140 = vunpack.c.h.b16 %v1858
        %v2141 = vunpack.c.l.b16 %v1859
        %v2142 = vunpack.c.h.b16 %v1859
        %v2143 = vunpack.c.l.b16 %v1860
        %v2144 = vunpack.c.h.b16 %v1860
        %v2145 = vunpack.c.l.b16 %v1861
        %v2146 = vunpack.c.h.b16 %v1861
        %v2147 = vunpack.c.l.b16 %v1862
        %v2148 = vunpack.c.h.b16 %v1862
        %v2149 = vunpack.c.l.b16 %v1863
        %v2150 = vunpack.c.h.b16 %v1863
        %v2151 = vunpack.c.l.b16 %v1864
        %v2152 = vunpack.c.h.b16 %v1864
        %v2153 = vunpack.c.l.b16 %v1865
        %v2154 = vunpack.c.h.b16 %v1865
        %v2155 = vunpack.c.l.b16 %v1866
        %v2156 = vunpack.c.h.b16 %v1866
        %v2157 = vunpack.c.l.b16 %v1867
        %v2158 = vunpack.c.h.b16 %v1867
        %v2159 = vunpack.c.l.b16 %v1868
        %v2160 = vunpack.c.h.b16 %v1868
        %v2161 = vunpack.c.l.b16 %v1869
        %v2162 = vunpack.c.h.b16 %v1869
        %v2163 = vunpack.c.l.b16 %v1870
        %v2164 = vunpack.c.h.b16 %v1870
        %v2165 = vunpack.c.l.b16 %v1871
        %v2166 = vunpack.c.h.b16 %v1871
        %v2167 = vunpack.c.l.b16 %v1872
        %v2168 = vunpack.c.h.b16 %v1872
        %v2169 = vunpack.c.l.b16 %v1873
        %v2170 = vunpack.c.h.b16 %v1873
        %v2171 = vunpack.c.l.b16 %v1874
        %v2172 = vunpack.c.h.b16 %v1874
        %v2173 = vunpack.c.l.b16 %v1875
        %v2174 = vunpack.c.h.b16 %v1875
        %v2175 = vunpack.c.l.b16 %v1876
        %v2176 = vunpack.c.h.b16 %v1876
        %v2177 = vunpack.c.l.b16 %v1877
        %v2178 = vunpack.c.h.b16 %v1877
        %v2179 = vunpack.c.l.b16 %v1878
        %v2180 = vunpack.c.h.b16 %v1878
        %v2181 = vunpack.c.l.b16 %v1879
        %v2182 = vunpack.c.h.b16 %v1879
        %v2183 = vunpack.c.l.b16 %v1880
        %v2184 = vunpack.c.h.b16 %v1880
        %v2185 = vunpack.c.l.b16 %v1881
        %v2186 = vunpack.c.h.b16 %v1881
        %v2187 = vunpack.c.l.b16 %v1882
        %v2188 = vunpack.c.h.b16 %v1882
        %v2189 = vunpack.c.l.b16 %v1883
        %v2190 = vunpack.c.h.b16 %v1883
        %v2191 = vunpack.c.l.b16 %v1884
        %v2192 = vunpack.c.h.b16 %v1884
        %v2193 = vunpack.c.l.b16 %v1885
        %v2194 = vunpack.c.h.b16 %v1885
        %v2195 = vunpack.c.l.b16 %v1886
        %v2196 = vunpack.c.h.b16 %v1886
        %v2197 = vunpack.c.l.b16 %v1887
        %v2198 = vunpack.c.h.b16 %v1887
        %v2199 = vunpack.c.l.b16 %v1888
        %v2200 = vunpack.c.h.b16 %v1888
        %v2201 = vunpack.c.l.b16 %v1889
        %v2202 = vunpack.c.h.b16 %v1889
        %v2203 = vunpack.c.l.b16 %v1890
        %v2204 = vunpack.c.h.b16 %v1890
        %v2205 = vunpack.c.l.b16 %v1891
        %v2206 = vunpack.c.h.b16 %v1891
        %v2207 = vunpack.c.l.b16 %v1892
        %v2208 = vunpack.c.h.b16 %v1892
        %v2209 = vunpack.c.l.b16 %v1893
        %v2210 = vunpack.c.h.b16 %v1893
        %v2211 = vunpack.c.l.b16 %v1894
        %v2212 = vunpack.c.h.b16 %v1894
        %v2213 = vunpack.c.l.b16 %v1895
        %v2214 = vunpack.c.h.b16 %v1895
        %v2215 = vunpack.c.l.b16 %v1896
        %v2216 = vunpack.c.h.b16 %v1896
        %v2217 = vunpack.c.l.b16 %v1897
        %v2218 = vunpack.c.h.b16 %v1897
        %v2219 = vunpack.c.l.b16 %v1898
        %v2220 = vunpack.c.h.b16 %v1898
        %v2221 = vunpack.c.l.b16 %v1899
        %v2222 = vunpack.c.h.b16 %v1899
        %v2223 = vunpack.c.l.b16 %v1900
        %v2224 = vunpack.c.h.b16 %v1900
        %v2225 = vunpack.c.l.b16 %v1901
        %v2226 = vunpack.c.h.b16 %v1901
        %v2227 = vunpack.c.l.b16 %v1902
        %v2228 = vunpack.c.h.b16 %v1902
        %v2229 = vunpack.c.l.b16 %v1903
        %v2230 = vunpack.c.h.b16 %v1903
        %v2231 = vunpack.c.l.b16 %v1904
        %v2232 = vunpack.c.h.b16 %v1904
        %v2233 = vunpack.c.l.b16 %v1905
        %v2234 = vunpack.c.h.b16 %v1905
        %v2235 = vunpack.c.l.b16 %v1906
        %v2236 = vunpack.c.h.b16 %v1906
        %v2237 = vunpack.c.l.b16 %v1907
        %v2238 = vunpack.c.h.b16 %v1907
        %v2239 = vunpack.c.l.b16 %v1908
        %v2240 = vunpack.c.h.b16 %v1908
        %v2241 = vunpack.c.l.b16 %v1909
        %v2242 = vunpack.c.h.b16 %v1909
        %v2243 = vunpack.c.l.b16 %v1910
        %v2244 = vunpack.c.h.b16 %v1910
        %v2245 = vunpack.c.l.b16 %v1911
        %v2246 = vunpack.c.h.b16 %v1911
        %v2247 = vunpack.c.l.b16 %v1912
        %v2248 = vunpack.c.h.b16 %v1912
        %v2249 = vunpack.c.l.b16 %v1913
        %v2250 = vunpack.c.h.b16 %v1913
        %v2251 = vunpack.c.l.b16 %v1914
        %v2252 = vunpack.c.h.b16 %v1914
        %v2253 = vunpack.c.l.b16 %v1915
        %v2254 = vunpack.c.h.b16 %v1915
        %v2255 = vunpack.c.l.b16 %v1916
        %v2256 = vunpack.c.h.b16 %v1916
        %v2257 = vunpack.c.l.b16 %v1917
        %v2258 = vunpack.c.h.b16 %v1917
        %v2259 = vunpack.c.l.b16 %v1918
        %v2260 = vunpack.c.h.b16 %v1918
        %v2261 = vunpack.c.l.b16 %v1919
        %v2262 = vunpack.c.h.b16 %v1919
        %v2263 = vunpack.c.l.b16 %v1920
        %v2264 = vunpack.c.h.b16 %v1920
        %v2265 = vunpack.c.l.b16 %v1921
        %v2266 = vunpack.c.h.b16 %v1921
        %v2267 = vunpack.c.l.b16 %v1922
        %v2268 = vunpack.c.h.b16 %v1922
        %v2269 = vunpack.c.l.b16 %v1923
        %v2270 = vunpack.c.h.b16 %v1923
        %v2271 = vunpack.c.l.b16 %v1924
        %v2272 = vunpack.c.h.b16 %v1924
        %v2273 = vunpack.c.l.b16 %v1925
        %v2274 = vunpack.c.h.b16 %v1925
        %v2275 = vunpack.c.l.b16 %v1926
        %v2276 = vunpack.c.h.b16 %v1926
        %v2277 = vunpack.c.l.b16 %v1927
        %v2278 = vunpack.c.h.b16 %v1927
        %v2279 = vunpack.c.l.b16 %v1928
        %v2280 = vunpack.c.h.b16 %v1928
        %v2281 = vunpack.c.l.b16 %v1929
        %v2282 = vunpack.c.h.b16 %v1929
        %v2283 = vunpack.c.l.b16 %v1930
        %v2284 = vunpack.c.h.b16 %v1930
        %v2285 = vunpack.c.l.b16 %v1931
        %v2286 = vunpack.c.h.b16 %v1931
        %v2287 = vunpack.c.l.b16 %v1932
        %v2288 = vunpack.c.h.b16 %v1932
        %v2289 = vunpack.c.l.b16 %v1933
        %v2290 = vunpack.c.h.b16 %v1933
        %v2291 = vunpack.c.l.b16 %v1934
        %v2292 = vunpack.c.h.b16 %v1934
        %v2293 = vunpack.c.l.b16 %v1935
        %v2294 = vunpack.c.h.b16 %v1935
        %v2295 = vunpack.c.l.b16 %v1936
        %v2296 = vunpack.c.h.b16 %v1936
        %v2297 = vunpack.c.l.b16 %v1937
        %v2298 = vunpack.c.h.b16 %v1937
        %v2299 = vunpack.c.l.b16 %v1938
        %v2300 = vunpack.c.h.b16 %v1938
        %v2301 = vunpack.c.l.b16 %v1939
        %v2302 = vunpack.c.h.b16 %v1939
        %v2303 = vunpack.c.l.b16 %v1940
        %v2304 = vunpack.c.h.b16 %v1940
        %v2305 = vunpack.c.l.b16 %v1941
        %v2306 = vunpack.c.h.b16 %v1941
        %v2307 = vunpack.c.l.b16 %v1942
        %v2308 = vunpack.c.h.b16 %v1942
        %v2309 = vunpack.c.l.b16 %v1943
        %v2310 = vunpack.c.h.b16 %v1943
        %v2311 = vunpack.c.l.b16 %v1944
        %v2312 = vunpack.c.h.b16 %v1944
        %v2313 = vunpack.c.l.b16 %v1945
        %v2314 = vunpack.c.h.b16 %v1945
        %v2315 = vunpack.c.l.b16 %v1946
        %v2316 = vunpack.c.h.b16 %v1946
        %v2317 = vunpack.c.l.b16 %v1947
        %v2318 = vunpack.c.h.b16 %v1947
        %v2319 = vunpack.c.l.b16 %v1948
        %v2320 = vunpack.c.h.b16 %v1948
        %v2321 = vunpack.c.l.b16 %v1949
        %v2322 = vunpack.c.h.b16 %v1949
        %v2323 = vunpack.c.l.b16 %v1950
        %v2324 = vunpack.c.h.b16 %v1950
        %v2325 = vunpack.c.l.b16 %v1951
        %v2326 = vunpack.c.h.b16 %v1951
        %v2327 = vunpack.c.l.b16 %v1952
        %v2328 = vunpack.c.h.b16 %v1952
        %v2329 = vunpack.c.l.b16 %v1953
        %v2330 = vunpack.c.h.b16 %v1953
        %v2331 = vunpack.c.l.b16 %v1954
        %v2332 = vunpack.c.h.b16 %v1954
        %v2333 = vunpack.c.l.b16 %v1955
        %v2334 = vunpack.c.h.b16 %v1955
        %v2335 = vunpack.c.l.b16 %v1956
        %v2336 = vunpack.c.h.b16 %v1956
        %v2337 = vunpack.c.l.b16 %v1957
        %v2338 = vunpack.c.h.b16 %v1957
        %v2339 = vunpack.c.l.b16 %v1958
        %v2340 = vunpack.c.h.b16 %v1958
        %v2341 = vunpack.c.l.b16 %v1959
        %v2342 = vunpack.c.h.b16 %v1959
        %v2343 = vunpack.c.l.b16 %v1960
        %v2344 = vunpack.c.h.b16 %v1960
        %v2345 = vunpack.c.l.b16 %v1961
        %v2346 = vunpack.c.h.b16 %v1961
        %v2347 = vunpack.c.l.b16 %v1962
        %v2348 = vunpack.c.h.b16 %v1962
        %v2349 = vunpack.c.l.b16 %v1963
        %v2350 = vunpack.c.h.b16 %v1963
        %v2351 = vunpack.c.l.b16 %v1964
        %v2352 = vunpack.c.h.b16 %v1964
        %v2353 = vunpack.c.l.b16 %v1965
        %v2354 = vunpack.c.h.b16 %v1965
        %v2355 = vunpack.c.l.b16 %v1966
        %v2356 = vunpack.c.h.b16 %v1966
        %v2357 = vunpack.c.l.b16 %v1967
        %v2358 = vunpack.c.h.b16 %v1967
        %v2359 = vunpack.c.l.b16 %v1968
        %v2360 = vunpack.c.h.b16 %v1968
        %v2361 = vunpack.c.l.b16 %v1969
        %v2362 = vunpack.c.h.b16 %v1969
        %v2363 = vunpack.c.l.b16 %v1970
        %v2364 = vunpack.c.h.b16 %v1970
        %v2365 = vunpack.c.l.b16 %v1971
        %v2366 = vunpack.c.h.b16 %v1971
        %v2367 = vunpack.c.l.b16 %v1972
        %v2368 = vunpack.c.h.b16 %v1972
        %v2369 = vunpack.c.l.b16 %v1973
        %v2370 = vunpack.c.h.b16 %v1973
        %v2371 = vunpack.c.l.b16 %v1974
        %v2372 = vunpack.c.h.b16 %v1974
        %v2373 = vunpack.c.l.b16 %v1975
        %v2374 = vunpack.c.h.b16 %v1975
        %v2375 = vunpack.c.l.b16 %v1976
        %v2376 = vunpack.c.h.b16 %v1976
        %v2377 = vunpack.c.l.b16 %v1977
        %v2378 = vunpack.c.h.b16 %v1977
        %v2379 = vunpack.c.l.b16 %v1978
        %v2380 = vunpack.c.h.b16 %v1978
        %v2381 = vunpack.c.l.b16 %v1979
        %v2382 = vunpack.c.h.b16 %v1979
        %v2383 = vunpack.c.l.b16 %v1980
        %v2384 = vunpack.c.h.b16 %v1980
        %v2385 = vunpack.c.l.b16 %v1981
        %v2386 = vunpack.c.h.b16 %v1981
        %v2387 = vunpack.c.l.b16 %v1982
        %v2388 = vunpack.c.h.b16 %v1982
        %v2389 = vpack.c.b16 %v2137, %v2133
        %v2390 = vpack.c.b16 %v2138, %v2134
        %v2391 = vpack.c.b16 %v2139, %v2135
        %v2392 = vpack.c.b16 %v2140, %v2136
        %v2393 = vpack.c.b16 %v2145, %v2141
        %v2394 = vpack.c.b16 %v2146, %v2142
        %v2395 = vpack.c.b16 %v2147, %v2143
        %v2396 = vpack.c.b16 %v2148, %v2144
        %v2397 = vpack.c.b16 %v2153, %v2149
        %v2398 = vpack.c.b16 %v2154, %v2150
        %v2399 = vpack.c.b16 %v2155, %v2151
        %v2400 = vpack.c.b16 %v2156, %v2152
        %v2401 = vpack.c.b16 %v2161, %v2157
        %v2402 = vpack.c.b16 %v2162, %v2158
        %v2403 = vpack.c.b16 %v2163, %v2159
        %v2404 = vpack.c.b16 %v2164, %v2160
        %v2405 = vpack.c.b16 %v2169, %v2165
        %v2406 = vpack.c.b16 %v2170, %v2166
        %v2407 = vpack.c.b16 %v2171, %v2167
        %v2408 = vpack.c.b16 %v2172, %v2168
        %v2409 = vpack.c.b16 %v2177, %v2173
        %v2410 = vpack.c.b16 %v2178, %v2174
        %v2411 = vpack.c.b16 %v2179, %v2175
        %v2412 = vpack.c.b16 %v2180, %v2176
        %v2413 = vpack.c.b16 %v2185, %v2181
        %v2414 = vpack.c.b16 %v2186, %v2182
        %v2415 = vpack.c.b16 %v2187, %v2183
        %v2416 = vpack.c.b16 %v2188, %v2184
        %v2417 = vpack.c.b16 %v2193, %v2189
        %v2418 = vpack.c.b16 %v2194, %v2190
        %v2419 = vpack.c.b16 %v2195, %v2191
        %v2420 = vpack.c.b16 %v2196, %v2192
        %v2421 = vpack.c.b16 %v2201, %v2197
        %v2422 = vpack.c.b16 %v2202, %v2198
        %v2423 = vpack.c.b16 %v2203, %v2199
        %v2424 = vpack.c.b16 %v2204, %v2200
        %v2425 = vpack.c.b16 %v2209, %v2205
        %v2426 = vpack.c.b16 %v2210, %v2206
        %v2427 = vpack.c.b16 %v2211, %v2207
        %v2428 = vpack.c.b16 %v2212, %v2208
        %v2429 = vpack.c.b16 %v2217, %v2213
        %v2430 = vpack.c.b16 %v2218, %v2214
        %v2431 = vpack.c.b16 %v2219, %v2215
        %v2432 = vpack.c.b16 %v2220, %v2216
        %v2433 = vpack.c.b16 %v2225, %v2221
        %v2434 = vpack.c.b16 %v2226, %v2222
        %v2435 = vpack.c.b16 %v2227, %v2223
        %v2436 = vpack.c.b16 %v2228, %v2224
        %v2437 = vpack.c.b16 %v2233, %v2229
        %v2438 = vpack.c.b16 %v2234, %v2230
        %v2439 = vpack.c.b16 %v2235, %v2231
        %v2440 = vpack.c.b16 %v2236, %v2232
        %v2441 = vpack.c.b16 %v2241, %v2237
        %v2442 = vpack.c.b16 %v2242, %v2238
        %v2443 = vpack.c.b16 %v2243, %v2239
        %v2444 = vpack.c.b16 %v2244, %v2240
        %v2445 = vpack.c.b16 %v2249, %v2245
        %v2446 = vpack.c.b16 %v2250, %v2246
        %v2447 = vpack.c.b16 %v2251, %v2247
        %v2448 = vpack.c.b16 %v2252, %v2248
        %v2449 = vpack.c.b16 %v2257, %v2253
        %v2450 = vpack.c.b16 %v2258, %v2254
        %v2451 = vpack.c.b16 %v2259, %v2255
        %v2452 = vpack.c.b16 %v2260, %v2256
        %v2453 = vpack.c.b16 %v2265, %v2261
        %v2454 = vpack.c.b16 %v2266, %v2262
        %v2455 = vpack.c.b16 %v2267, %v2263
        %v2456 = vpack.c.b16 %v2268, %v2264
        %v2457 = vpack.c.b16 %v2273, %v2269
        %v2458 = vpack.c.b16 %v2274, %v2270
        %v2459 = vpack.c.b16 %v2275, %v2271
        %v2460 = vpack.c.b16 %v2276, %v2272
        %v2461 = vpack.c.b16 %v2281, %v2277
        %v2462 = vpack.c.b16 %v2282, %v2278
        %v2463 = vpack.c.b16 %v2283, %v2279
        %v2464 = vpack.c.b16 %v2284, %v2280
        %v2465 = vpack.c.b16 %v2289, %v2285
        %v2466 = vpack.c.b16 %v2290, %v2286
        %v2467 = vpack.c.b16 %v2291, %v2287
        %v2468 = vpack.c.b16 %v2292, %v2288
        %v2469 = vpack.c.b16 %v2297, %v2293
        %v2470 = vpack.c.b16 %v2298, %v2294
        %v2471 = vpack.c.b16 %v2299, %v2295
        %v2472 = vpack.c.b16 %v2300, %v2296
        %v2473 = vpack.c.b16 %v2305, %v2301
        %v2474 = vpack.c.b16 %v2306, %v2302
        %v2475 = vpack.c.b16 %v2307, %v2303
        %v2476 = vpack.c.b16 %v2308, %v2304
        %v2477 = vpack.c.b16 %v2313, %v2309
        %v2478 = vpack.c.b16 %v2314, %v2310
        %v2479 = vpack.c.b16 %v2315, %v2311
        %v2480 = vpack.c.b16 %v2316, %v2312
        %v2481 = vpack.c.b16 %v2321, %v2317
        %v2482 = vpack.c.b16 %v2322, %v2318
        %v2483 = vpack.c.b16 %v2323, %v2319
        %v2484 = vpack.c.b16 %v2324, %v2320
        %v2485 = vpack.c.b16 %v2329, %v2325
        %v2486 = vpack.c.b16 %v2330, %v2326
        %v2487 = vpack.c.b16 %v2331, %v2327
        %v2488 = vpack.c.b16 %v2332, %v2328
        %v2489 = vpack.c.b16 %v2337, %v2333
        %v2490 = vpack.c.b16 %v2338, %v2334
        %v2491 = vpack.c.b16 %v2339, %v2335
        %v2492 = vpack.c.b16 %v2340, %v2336
        %v2493 = vpack.c.b16 %v2345, %v2341
        %v2494 = vpack.c.b16 %v2346, %v2342
        %v2495 = vpack.c.b16 %v2347, %v2343
        %v2496 = vpack.c.b16 %v2348, %v2344
        %v2497 = vpack.c.b16 %v2353, %v2349
        %v2498 = vpack.c.b16 %v2354, %v2350
        %v2499 = vpack.c.b16 %v2355, %v2351
        %v2500 = vpack.c.b16 %v2356, %v2352
        %v2501 = vpack.c.b16 %v2361, %v2357
        %v2502 = vpack.c.b16 %v2362, %v2358
        %v2503 = vpack.c.b16 %v2363, %v2359
        %v2504 = vpack.c.b16 %v2364, %v2360
        %v2505 = vpack.c.b16 %v2369, %v2365
        %v2506 = vpack.c.b16 %v2370, %v2366
        %v2507 = vpack.c.b16 %v2371, %v2367
        %v2508 = vpack.c.b16 %v2372, %v2368
        %v2509 = vpack.c.b16 %v2377, %v2373
        %v2510 = vpack.c.b16 %v2378, %v2374
        %v2511 = vpack.c.b16 %v2379, %v2375
        %v2512 = vpack.c.b16 %v2380, %v2376
        %v2513 = vpack.c.b16 %v2385, %v2381
        %v2514 = vpack.c.b16 %v2386, %v2382
        %v2515 = vpack.c.b16 %v2387, %v2383
        %v2516 = vpack.c.b16 %v2388, %v2384
        %2645 = vmatprep.subr.bf16.mxu0 %v2390
        %2646 = vmatpush1.bf16.msra.mxu0 %v2389
        %2647 = vmatprep.subr.bf16.mxu0 %v2394
        %2648 = vmatpush1.bf16.msra.mxu0 %v2393
        %2649 = vmatprep.subr.bf16.mxu0 %v2398
        %2650 = vmatpush1.bf16.msra.mxu0 %v2397
        %2651 = vmatprep.subr.bf16.mxu0 %v2402
        %2652 = vmatpush1.bf16.msra.mxu0 %v2401
        %2653 = vmatprep.subr.bf16.mxu0 %v2406
        %2654 = vmatpush1.bf16.msra.mxu0 %v2405
        %2655 = vmatprep.subr.bf16.mxu0 %v2410
        %2656 = vmatpush1.bf16.msra.mxu0 %v2409
        %2657 = vmatprep.subr.bf16.mxu0 %v2414
        %2658 = vmatpush1.bf16.msra.mxu0 %v2413
        %2659 = vmatprep.subr.bf16.mxu0 %v2418
        %2660 = vmatpush1.bf16.msra.mxu0 %v2417
        %2661 = vmatprep.subr.bf16.mxu0 %v2422
        %2662 = vmatpush1.bf16.msra.mxu0 %v2421
        %2663 = vmatprep.subr.bf16.mxu0 %v2426
        %2664 = vmatpush1.bf16.msra.mxu0 %v2425
        %2665 = vmatprep.subr.bf16.mxu0 %v2430
        %2666 = vmatpush1.bf16.msra.mxu0 %v2429
        %2667 = vmatprep.subr.bf16.mxu0 %v2434
        %2668 = vmatpush1.bf16.msra.mxu0 %v2433
        %2669 = vmatprep.subr.bf16.mxu0 %v2438
        %2670 = vmatpush1.bf16.msra.mxu0 %v2437
        %2671 = vmatprep.subr.bf16.mxu0 %v2442
        %2672 = vmatpush1.bf16.msra.mxu0 %v2441
        %2673 = vmatprep.subr.bf16.mxu0 %v2446
        %2674 = vmatpush1.bf16.msra.mxu0 %v2445
        %2675 = vmatprep.subr.bf16.mxu0 %v2450
        %2676 = vmatpush1.bf16.msra.mxu0 %v2449
        %2677 = vmatprep.mubr.bf16.mxu0 %v1852
        %2678 = vmatmul.mubr.bf16.gmra.mrb[0].mxu0 %v1851
        %v2679 = vpop.f32.mrb[0].mxu0
        %v2680 = vadd.f32 %v1988, %v2679
        %v2681 = vpop.f32.mrb[0].mxu0
        %v2682 = vadd.f32 %v1992, %v2681
        %v2683 = vpop.f32.mrb[0].mxu0
        %v2684 = vadd.f32 %v1988, %v2683
        %v2685 = vpop.f32.mrb[0].mxu0
        %v2686 = vadd.f32 %v1992, %v2685
        %2687 = vdwg.mxu0
        %2688 = vmatprep.subr.bf16.mxu0 %v2454
        %2689 = vmatpush1.bf16.msra.mxu0 %v2453
        %2690 = vmatprep.subr.bf16.mxu0 %v2458
        %2691 = vmatpush1.bf16.msra.mxu0 %v2457
        %2692 = vmatprep.subr.bf16.mxu0 %v2462
        %2693 = vmatpush1.bf16.msra.mxu0 %v2461
        %2694 = vmatprep.subr.bf16.mxu0 %v2466
        %2695 = vmatpush1.bf16.msra.mxu0 %v2465
        %2696 = vmatprep.subr.bf16.mxu0 %v2470
        %2697 = vmatpush1.bf16.msra.mxu0 %v2469
        %2698 = vmatprep.subr.bf16.mxu0 %v2474
        %2699 = vmatpush1.bf16.msra.mxu0 %v2473
        %2700 = vmatprep.subr.bf16.mxu0 %v2478
        %2701 = vmatpush1.bf16.msra.mxu0 %v2477
        %2702 = vmatprep.subr.bf16.mxu0 %v2482
        %2703 = vmatpush1.bf16.msra.mxu0 %v2481
        %2704 = vmatprep.subr.bf16.mxu0 %v2486
        %2705 = vmatpush1.bf16.msra.mxu0 %v2485
        %2706 = vmatprep.subr.bf16.mxu0 %v2490
        %2707 = vmatpush1.bf16.msra.mxu0 %v2489
        %2708 = vmatprep.subr.bf16.mxu0 %v2494
        %2709 = vmatpush1.bf16.msra.mxu0 %v2493
        %2710 = vmatprep.subr.bf16.mxu0 %v2498
        %2711 = vmatpush1.bf16.msra.mxu0 %v2497
        %2712 = vmatprep.subr.bf16.mxu0 %v2502
        %2713 = vmatpush1.bf16.msra.mxu0 %v2501
        %2714 = vmatprep.subr.bf16.mxu0 %v2506
        %2715 = vmatpush1.bf16.msra.mxu0 %v2505
        %2716 = vmatprep.subr.bf16.mxu0 %v2510
        %2717 = vmatpush1.bf16.msra.mxu0 %v2509
        %2718 = vmatprep.subr.bf16.mxu0 %v2514
        %2719 = vmatpush1.bf16.msra.mxu0 %v2513
        %2720 = vmatprep.mubr.bf16.mxu0 %v1854
        %2721 = vmatmul.mubr.bf16.gmra.mrb[0].mxu0 %v1853
        %v2722 = vpop.f32.mrb[0].mxu0
        %v2723 = vadd.f32 %v2680, %v2722
        %v2724 = vpop.f32.mrb[0].mxu0
        %v2725 = vadd.f32 %v2682, %v2724
        %v2726 = vpop.f32.mrb[0].mxu0
        %v2727 = vadd.f32 %v2684, %v2726
        %v2728 = vpop.f32.mrb[0].mxu0
        %v2729 = vadd.f32 %v2686, %v2728
        %2730 = vdwg.mxu0
        %2731 = vmatprep.subr.bf16.mxu0 %v2392
        %2732 = vmatpush1.bf16.msra.mxu0 %v2391
        %2733 = vmatprep.subr.bf16.mxu0 %v2396
        %2734 = vmatpush1.bf16.msra.mxu0 %v2395
        %2735 = vmatprep.subr.bf16.mxu0 %v2400
        %2736 = vmatpush1.bf16.msra.mxu0 %v2399
        %2737 = vmatprep.subr.bf16.mxu0 %v2404
        %2738 = vmatpush1.bf16.msra.mxu0 %v2403
        %2739 = vmatprep.subr.bf16.mxu0 %v2408
        %2740 = vmatpush1.bf16.msra.mxu0 %v2407
        %2741 = vmatprep.subr.bf16.mxu0 %v2412
        %2742 = vmatpush1.bf16.msra.mxu0 %v2411
        %2743 = vmatprep.subr.bf16.mxu0 %v2416
        %2744 = vmatpush1.bf16.msra.mxu0 %v2415
        %2745 = vmatprep.subr.bf16.mxu0 %v2420
        %2746 = vmatpush1.bf16.msra.mxu0 %v2419
        %2747 = vmatprep.subr.bf16.mxu0 %v2424
        %2748 = vmatpush1.bf16.msra.mxu0 %v2423
        %2749 = vmatprep.subr.bf16.mxu0 %v2428
        %2750 = vmatpush1.bf16.msra.mxu0 %v2427
        %2751 = vmatprep.subr.bf16.mxu0 %v2432
        %2752 = vmatpush1.bf16.msra.mxu0 %v2431
        %2753 = vmatprep.subr.bf16.mxu0 %v2436
        %2754 = vmatpush1.bf16.msra.mxu0 %v2435
        %2755 = vmatprep.subr.bf16.mxu0 %v2440
        %2756 = vmatpush1.bf16.msra.mxu0 %v2439
        %2757 = vmatprep.subr.bf16.mxu0 %v2444
        %2758 = vmatpush1.bf16.msra.mxu0 %v2443
        %2759 = vmatprep.subr.bf16.mxu0 %v2448
        %2760 = vmatpush1.bf16.msra.mxu0 %v2447
        %2761 = vmatprep.subr.bf16.mxu0 %v2452
        %2762 = vmatpush1.bf16.msra.mxu0 %v2451
        %2763 = vmatprep.mubr.bf16.mxu0 %v1852
        %2764 = vmatmul.mubr.bf16.gmra.mrb[0].mxu0 %v1851
        %v2765 = vpop.f32.mrb[0].mxu0
        %v2766 = vadd.f32 %v1996, %v2765
        %v2767 = vpop.f32.mrb[0].mxu0
        %v2768 = vadd.f32 %v2000, %v2767
        %v2769 = vpop.f32.mrb[0].mxu0
        %v2770 = vadd.f32 %v1996, %v2769
        %v2771 = vpop.f32.mrb[0].mxu0
        %v2772 = vadd.f32 %v2000, %v2771
        %2773 = vdwg.mxu0
        %2774 = vmatprep.subr.bf16.mxu0 %v2456
        %2775 = vmatpush1.bf16.msra.mxu0 %v2455
        %2776 = vmatprep.subr.bf16.mxu0 %v2460
        %2777 = vmatpush1.bf16.msra.mxu0 %v2459
        %2778 = vmatprep.subr.bf16.mxu0 %v2464
        %2779 = vmatpush1.bf16.msra.mxu0 %v2463
        %2780 = vmatprep.subr.bf16.mxu0 %v2468
        %2781 = vmatpush1.bf16.msra.mxu0 %v2467
        %2782 = vmatprep.subr.bf16.mxu0 %v2472
        %2783 = vmatpush1.bf16.msra.mxu0 %v2471
        %2784 = vmatprep.subr.bf16.mxu0 %v2476
        %2785 = vmatpush1.bf16.msra.mxu0 %v2475
        %2786 = vmatprep.subr.bf16.mxu0 %v2480
        %2787 = vmatpush1.bf16.msra.mxu0 %v2479
        %2788 = vmatprep.subr.bf16.mxu0 %v2484
        %2789 = vmatpush1.bf16.msra.mxu0 %v2483
        %2790 = vmatprep.subr.bf16.mxu0 %v2488
        %2791 = vmatpush1.bf16.msra.mxu0 %v2487
        %2792 = vmatprep.subr.bf16.mxu0 %v2492
        %2793 = vmatpush1.bf16.msra.mxu0 %v2491
        %2794 = vmatprep.subr.bf16.mxu0 %v2496
        %2795 = vmatpush1.bf16.msra.mxu0 %v2495
        %2796 = vmatprep.subr.bf16.mxu0 %v2500
        %2797 = vmatpush1.bf16.msra.mxu0 %v2499
        %2798 = vmatprep.subr.bf16.mxu0 %v2504
        %2799 = vmatpush1.bf16.msra.mxu0 %v2503
        %2800 = vmatprep.subr.bf16.mxu0 %v2508
        %2801 = vmatpush1.bf16.msra.mxu0 %v2507
        %2802 = vmatprep.subr.bf16.mxu0 %v2512
        %2803 = vmatpush1.bf16.msra.mxu0 %v2511
        %2804 = vmatprep.subr.bf16.mxu0 %v2516
        %2805 = vmatpush1.bf16.msra.mxu0 %v2515
        %2806 = vmatprep.mubr.bf16.mxu0 %v1854
        %2807 = vmatmul.mubr.bf16.gmra.mrb[0].mxu0 %v1853
        %v2808 = vpop.f32.mrb[0].mxu0
        %v2809 = vadd.f32 %v2766, %v2808
        %v2810 = vpop.f32.mrb[0].mxu0
        %v2811 = vadd.f32 %v2768, %v2810
        %v2812 = vpop.f32.mrb[0].mxu0
        %v2813 = vadd.f32 %v2770, %v2812
        %v2814 = vpop.f32.mrb[0].mxu0
        %v2815 = vadd.f32 %v2772, %v2814
        %2816 = vdwg.mxu0
        %v2817 = vmax.f32 %v2723, 0.0
        %v2818 = vmax.f32 %v2725, 0.0
        %v2819 = vmax.f32 %v2809, 0.0
        %v2820 = vmax.f32 %v2811, 0.0
        %v2821 = vmax.f32 %v2727, 0.0
        %v2822 = vmax.f32 %v2729, 0.0
        %v2823 = vmax.f32 %v2813, 0.0
        %v2824 = vmax.f32 %v2815, 0.0
        %2825 = vst [vmem:[%s272] sm:$0xff] %v2817
        %2826 = vst [vmem:[%s272 + $0x8] sm:$0xff] %v2818
        %2827 = vst [vmem:[%s272 + $0x10] sm:$0xff] %v2819
        %2828 = vst [vmem:[%s272 + $0x18] sm:$0xff] %v2820
        %2829 = vst [vmem:[%s272 + $0x20] sm:$0xff] %v2821
        %2830 = vst [vmem:[%s272 + $0x28] sm:$0xff] %v2822
        %2831 = vst [vmem:[%s272 + $0x30] sm:$0xff] %v2823
        %2832 = vst [vmem:[%s272 + $0x38] sm:$0xff] %v2824
        %s2833 = sand.u32 %s141, 1
        %s2834 = scalar_lea.sflag [#allocation4], %s2833
        %s2835 = sand.u32 %s141, 1
        %s2836 = smul.addr %s2835, 64
        %s2837 = scalar_lea.vmem [#allocation8], %s2836
        // Predicated region
        $region53: #{tpu_custom_call.1} parent=39 // pred_check
          %p2838 = pneg %p151
        $region54: #{tpu_custom_call.1} parent=39 // pred_check_branch
          %2840 = sbr.rel (%p2838) target = $region56
        $region55: #{tpu_custom_call.1} parent=39 // pred_region
          %s2841 = smul.u32 2, %s23
          %s2843 = ssub.s32 1024, 1024
          %2844 = vsyncadd %s2834, %s2843
          %s2845 = smul.addr %s2841, 4
          %s2846 = smul.addr %s2845, 128
          %s2847 = scalar_lea.hbm %s5, %s2846
          %s2848 = sshll.u32 %s2837, 4
          %s2849 = int_to_ptr.vmem [resolvable:$true] %s2848
          %2854 = dma.vmem_to_hbm [thread:$0]  %s2849, 1024, %s2847, %s2834, 512, 512, 32
        $region56: #{tpu_custom_call.1} parent=39 // pred_fallthru
          _
      $region40: #{tpu_custom_call.1} parent=5 // pred_fallthru
        _
      %p2855 = scmp.le.s32.totalorder 2, %s18
      // Predicated region
      $region57: #{tpu_custom_call.1} parent=5 // pred_check
        %p2856 = pneg %p2855
      $region58: #{tpu_custom_call.1} parent=5 // pred_check_branch
        %2858 = sbr.rel (%p2856) target = $region60
      $region59: #{tpu_custom_call.1} parent=5 // pred_region
        %s2859 = ssub.s32 %s18, 2
        // Predicated region
        $region61: #{tpu_custom_call.1} parent=59 // pred_check
          %p2860 = pneg %p157
        $region62: #{tpu_custom_call.1} parent=59 // pred_check_branch
          %2862 = sbr.rel (%p2860) target = $region64
        $region63: #{tpu_custom_call.1} parent=59 // pred_region
          %s2863 = sand.u32 %s142, 1
          %s2864 = scalar_lea.sflag [#allocation4], %s2863
          %s2865 = sand.u32 %s142, 1
          %s2866 = smul.addr %s2865, 64
          %s2867 = scalar_lea.vmem [#allocation8], %s2866
          %2868 = dma.done %s2864, 1024
        $region64: #{tpu_custom_call.1} parent=59 // pred_fallthru
          _
      $region60: #{tpu_custom_call.1} parent=5 // pred_fallthru
        _
    $region6: #{tpu_custom_call.1} parent=1 // loop_footer
      %s22 = sadd.s32 1, %s18
    $region7: #{tpu_custom_call.1} parent=1 // loop_footer_branch
      %17 = sbr.rel target = $region3
    $region8: #{tpu_custom_call.1} parent=1 // loop_exit
      _
    %2869 = vsyncpa [#allocation3], 1
    %s2870 = scalar_lea.sflag [#allocation3], 1
    %2871 = vsyncpa %s2870, 1
    %2872 = vsyncpa [#allocation6], 1
    %2873 = vsyncpa [#allocation4], 1
    %s2874 = scalar_lea.sflag [#allocation4], 1
    %2875 = vsyncpa %s2874, 1

</llo_original>
